<compile_context>
chip_gen: v5e
topology: v5e:2x2
jax: 0.10.0
libtpu: 0.0.40
codegen_flags: <defaults>
</compile_context>

<pallas_src>
import jax
import jax.numpy as jnp
from jax.experimental import pallas as pl
from jax.experimental.pallas import tpu as pltpu


# --------------------------------------------------------------------------
# Kernel
# --------------------------------------------------------------------------
def _autoencoder_kernel(x_ref, w1_ref, b1_ref, w2_ref, b2_ref, o_ref):
    # x_ref:  (TILE_N, F_PAD)   f32   flattened image tile (cast to bf16 here)
    # w1_ref: (F_PAD, H_PAD)    bf16  encoder weight (stored transposed)
    # b1_ref: (1, H_PAD)        f32   encoder bias (zero-padded)
    # w2_ref: (H_PAD, F_PAD)    bf16  decoder weight (stored transposed)
    # b2_ref: (1, F_PAD)        f32   decoder bias (zero-padded)
    # o_ref:  (TILE_N, F_PAD)   bf16  reconstructed (flattened) tile
    x = x_ref[...].astype(jnp.bfloat16)           # in-register cast (VPU)

    # Encoder: Linear (bf16 MXU operands, f32 accumulation) + ReLU in f32.
    h = jnp.dot(x, w1_ref[...], preferred_element_type=jnp.float32)
    h = jnp.maximum(h + b1_ref[...], 0.0)

    # Decoder: Linear + Sigmoid.  Sigmoid kept on the EUP slot:
    #   exp (EUP) then approximate reciprocal (EUP), all in f32.
    y = jnp.dot(h.astype(jnp.bfloat16), w2_ref[...],
                preferred_element_type=jnp.float32)
    y = y + b2_ref[...]
    sig = pl.reciprocal(1.0 + jnp.exp(-y), approx=True)
    o_ref[...] = sig.astype(o_ref.dtype)


# --------------------------------------------------------------------------
# Helpers
# --------------------------------------------------------------------------
def _round_up(a, b):
    return ((a + b - 1) // b) * b


def _default_tile_n():
    """256 on v6e/v7x (fills the 256-wide MXU), 128 on v5e."""
    try:
        kind = jax.devices()[0].device_kind.lower()
    except Exception:
        return 256
    if "v5 lite" in kind or "v5e" in kind or "v5lite" in kind:
        return 128
    return 256


def _choose_tile_n(n, requested):
    """Sublane-aligned batch tile; >=2 tiles when possible (v7x megacore)."""
    n_sub = _round_up(max(n, 1), 8)
    tile_n = _round_up(min(requested, n_sub), 8)
    # Ensure at least two batch tiles whenever there are enough rows so that
    # dimension_semantics=("parallel",) can shard across v7x's 2 TensorCores.
    if n_sub >= 16 and n_sub <= tile_n:
        tile_n = _round_up((n_sub + 1) // 2, 8)
    n_pad = _round_up(n_sub, tile_n)
    return tile_n, n_pad


def _vmem_limit_bytes(tile_n, f_pad, h_pad, single_buffer_weights):
    wbuf = 1 if single_buffer_weights else 2
    need = (2 * tile_n * f_pad * 4                      # x tiles (f32, 2-buf)
            + 2 * tile_n * f_pad * 2                    # out tiles (bf16, 2-buf)
            + wbuf * (f_pad * h_pad + h_pad * f_pad) * 2  # weights (bf16)
            + wbuf * (h_pad + f_pad) * 4)               # biases (f32)
    need += 4 * 1024 * 1024                             # internal scratch headroom
    # Clamp: >=24 MiB (cheap), <=56 MiB (safe ceiling on v7x's 64 MiB VMEM).
    return int(min(max(need, 24 * 1024 * 1024), 56 * 1024 * 1024))


def prepare_params(w1, b1, w2, b2):
    """One-time (model-build-time) padding + casting of the weights.

    w1: (F, HIDDEN), b1: (HIDDEN,), w2: (HIDDEN, F), b2: (F,)  -- all f32,
    stored as (in, out) so the kernel computes x @ W directly.
    """
    f_dim, hidden = w1.shape
    h_pad = _round_up(hidden, 128)   # lane width / MXU K & N dims
    f_pad = _round_up(f_dim, 128)    # lane-dense input/output last dim

    w1p = jnp.pad(w1, ((0, f_pad - f_dim), (0, h_pad - hidden))).astype(jnp.bfloat16)
    b1p = jnp.pad(b1, (0, h_pad - hidden)).reshape(1, h_pad).astype(jnp.float32)
    w2p = jnp.pad(w2, ((0, h_pad - hidden), (0, f_pad - f_dim))).astype(jnp.bfloat16)
    b2p = jnp.pad(b2, (0, f_pad - f_dim)).reshape(1, f_pad).astype(jnp.float32)
    return {"w1": w1p, "b1": b1p, "w2": w2p, "b2": b2p,
            "f_dim": f_dim, "hidden": hidden, "f_pad": f_pad, "h_pad": h_pad}


def _pallas_forward(x, params, *, tile_n, n_pad, single_buffer_weights):
    f_pad, h_pad = params["f_pad"], params["h_pad"]
    grid = (n_pad // tile_n,)

    if single_buffer_weights:
        res_kw = dict(pipeline_mode=pl.Buffered(1))   # resident: 1 buffer
    else:
        res_kw = {}

    in_specs = [
        pl.BlockSpec((tile_n, f_pad), lambda i: (i, 0)),            # x tile
        pl.BlockSpec((f_pad, h_pad), lambda i: (0, 0), **res_kw),   # w1 (resident)
        pl.BlockSpec((1, h_pad), lambda i: (0, 0), **res_kw),       # b1 (resident)
        pl.BlockSpec((h_pad, f_pad), lambda i: (0, 0), **res_kw),   # w2 (resident)
        pl.BlockSpec((1, f_pad), lambda i: (0, 0), **res_kw),       # b2 (resident)
    ]

    # Advisory cost model: 2 matmuls + exp/recip per output element.
    flops = 4 * n_pad * f_pad * h_pad
    transcendentals = 2 * n_pad * f_pad
    bytes_accessed = (n_pad * f_pad * 4            # x read (f32)
                      + n_pad * f_pad * 2          # out write (bf16)
                      + 2 * f_pad * h_pad * 2      # both weights (bf16)
                      + (h_pad + f_pad) * 4)       # biases (f32)

    return pl.pallas_call(
        _autoencoder_kernel,
        out_shape=jax.ShapeDtypeStruct((n_pad, f_pad), jnp.bfloat16),
        grid=grid,
        in_specs=in_specs,
        out_specs=pl.BlockSpec((tile_n, f_pad), lambda i: (i, 0)),
        compiler_params=pltpu.CompilerParams(
            dimension_semantics=("parallel",),      # megacore over batch tiles
            vmem_limit_bytes=_vmem_limit_bytes(
                tile_n, f_pad, h_pad, single_buffer_weights),
        ),
        cost_estimate=pl.CostEstimate(
            flops=flops,
            transcendentals=transcendentals,
            bytes_accessed=bytes_accessed),
    )(x, params["w1"], params["b1"], params["w2"], params["b2"])


def autoencoder_forward(image, params, *, tile_n=None, out_dtype=jnp.bfloat16):
    """image: (N, C, H, W) float32 -> (N, C, H, W) `out_dtype` reconstruction."""
    n, c, h, w = image.shape
    f_dim = c * h * w
    assert f_dim == params["f_dim"], "prepared params do not match image shape"
    f_pad = params["f_pad"]

    if tile_n is None:
        tile_n = _default_tile_n()
    tile_n, n_pad = _choose_tile_n(n, tile_n)

    # Flatten NCHW -> (N, F); pad rows to the tile grid and columns to a
    # lane-dense multiple of 128.  Stays f32: the bf16 cast happens in-kernel.
    x = image.reshape(n, f_dim)
    x = jnp.pad(x, ((0, n_pad - n), (0, f_pad - f_dim)))

    try:
        out_flat = _pallas_forward(x, params, tile_n=tile_n, n_pad=n_pad,
                                   single_buffer_weights=True)
    except Exception:
        # Older Pallas without pipeline_mode / Buffered(1) support.
        out_flat = _pallas_forward(x, params, tile_n=tile_n, n_pad=n_pad,
                                   single_buffer_weights=False)

    out = out_flat[:n, :f_dim].reshape(n, c, h, w)
    if out.dtype != out_dtype:
        out = out.astype(out_dtype)
    return out


# --------------------------------------------------------------------------
# Reference + demo
# --------------------------------------------------------------------------
def _init_params(key, f_dim, hidden):
    """Deterministic init mimicking torch.nn.Linear (uniform +/- 1/sqrt(fan_in))."""
    k1, k2, k3, k4 = jax.random.split(key, 4)
    bound1 = 1.0 / jnp.sqrt(jnp.float32(f_dim))
    bound2 = 1.0 / jnp.sqrt(jnp.float32(hidden))
    # stored as (in, out) so the kernel computes x @ W directly
    w1 = jax.random.uniform(k1, (f_dim, hidden), jnp.float32, -bound1, bound1)
    b1 = jax.random.uniform(k2, (hidden,), jnp.float32, -bound1, bound1)
    w2 = jax.random.uniform(k3, (hidden, f_dim), jnp.float32, -bound2, bound2)
    b2 = jax.random.uniform(k4, (f_dim,), jnp.float32, -bound2, bound2)
    return w1, b1, w2, b2


def _reference(image, w1, b1, w2, b2):
    n = image.shape[0]
    x = image.reshape(n, -1)
    h = jnp.maximum(x @ w1 + b1, 0.0)
    y = jax.nn.sigmoid(h @ w2 + b2)
    return y.reshape(image.shape)


if __name__ == "__main__":
    key = jax.random.PRNGKey(0)
    k_img, k_par = jax.random.split(key)

    N, C, H, W = 2, 4, 16, 16
    HIDDEN = 32
    F_DIM = C * H * W  # 1024

    image = jax.random.normal(k_img, (N, C, H, W), dtype=jnp.float32)
    w1, b1, w2, b2 = _init_params(k_par, F_DIM, HIDDEN)

    # One-time weight prep (pad + cast) -- done at model build time.
    params = prepare_params(w1, b1, w2, b2)

    out = autoencoder_forward(image, params)
    out = jax.block_until_ready(out)

    ref = _reference(image, w1, b1, w2, b2)
    assert out.shape == (N, C, H, W)
    # bf16 MXU operands + bf16 output + approx reciprocal -> loose tolerance.
    err = float(jnp.max(jnp.abs(out.astype(jnp.float32) - ref)))
    assert err < 2e-2, err

    print("KERNEL_OK")
</pallas_src>

<mosaic_0001>
module attributes {stable_mosaic.version = 11 : i64} {
  func.func @_autoencoder_kernel(%arg0: i32, %arg1: memref<8x1024xf32, #tpu.memory_space<vmem>>, %arg2: memref<1024x128xbf16, #tpu.memory_space<vmem>>, %arg3: memref<1x128xf32, #tpu.memory_space<vmem>>, %arg4: memref<128x1024xbf16, #tpu.memory_space<vmem>>, %arg5: memref<1x1024xf32, #tpu.memory_space<vmem>>, %arg6: memref<8x1024xbf16, #tpu.memory_space<vmem>>) attributes {dimension_semantics = [#tpu.dimension_semantics<parallel>], iteration_bounds = array<i64: 1>, scalar_prefetch = 0 : i64, scratch_operands = 0 : i64, tpu.core_type = #tpu.core_type<tc>, window_params = [{transform_indices = @transform_0, window_bounds = array<i64: 8, 1024>}, {pipeline_mode = #tpu.pipeline_mode<synchronous>, transform_indices = @transform_1, window_bounds = array<i64: 1024, 128>}, {pipeline_mode = #tpu.pipeline_mode<synchronous>, transform_indices = @transform_2, window_bounds = array<i64: 1, 128>}, {pipeline_mode = #tpu.pipeline_mode<synchronous>, transform_indices = @transform_3, window_bounds = array<i64: 128, 1024>}, {pipeline_mode = #tpu.pipeline_mode<synchronous>, transform_indices = @transform_4, window_bounds = array<i64: 1, 1024>}, {transform_indices = @transform_5, window_bounds = array<i64: 8, 1024>}]} {
    %c0 = arith.constant 0 : index
    %c0_0 = arith.constant 0 : index
    %0 = vector.load %arg1[%c0, %c0_0] : memref<8x1024xf32, #tpu.memory_space<vmem>>, vector<8x1024xf32>
    %1 = arith.truncf %0 : vector<8x1024xf32> to vector<8x1024xbf16>
    %c0_1 = arith.constant 0 : index
    %c0_2 = arith.constant 0 : index
    %2 = vector.load %arg2[%c0_1, %c0_2] : memref<1024x128xbf16, #tpu.memory_space<vmem>>, vector<1024x128xbf16>
    %cst = arith.constant dense<0.000000e+00> : vector<8x128xf32>
    %3 = tpu.matmul %1, %2, %cst {dimension_numbers = #tpu.dot_dimension_numbers<[1], [0], [0], [1], [0, 0, 1, 1], [], []>} : vector<8x1024xbf16>, vector<1024x128xbf16>, vector<8x128xf32> -> vector<8x128xf32>
    %c0_3 = arith.constant 0 : index
    %c0_4 = arith.constant 0 : index
    %4 = vector.load %arg3[%c0_3, %c0_4] : memref<1x128xf32, #tpu.memory_space<vmem>>, vector<1x128xf32>
    %5 = vector.broadcast %4 : vector<1x128xf32> to vector<8x128xf32>
    %6 = arith.addf %3, %5 : vector<8x128xf32>
    %cst_5 = arith.constant 0.000000e+00 : f32
    %7 = vector.broadcast %cst_5 : f32 to vector<8x128xf32>
    %8 = arith.maximumf %6, %7 : vector<8x128xf32>
    %9 = arith.truncf %8 : vector<8x128xf32> to vector<8x128xbf16>
    %c0_6 = arith.constant 0 : index
    %c0_7 = arith.constant 0 : index
    %10 = vector.load %arg4[%c0_6, %c0_7] : memref<128x1024xbf16, #tpu.memory_space<vmem>>, vector<128x1024xbf16>
    %cst_8 = arith.constant dense<0.000000e+00> : vector<8x1024xf32>
    %11 = tpu.matmul %9, %10, %cst_8 {dimension_numbers = #tpu.dot_dimension_numbers<[1], [0], [0], [1], [0, 0, 1, 1], [], []>} : vector<8x128xbf16>, vector<128x1024xbf16>, vector<8x1024xf32> -> vector<8x1024xf32>
    %c0_9 = arith.constant 0 : index
    %c0_10 = arith.constant 0 : index
    %12 = vector.load %arg5[%c0_9, %c0_10] : memref<1x1024xf32, #tpu.memory_space<vmem>>, vector<1x1024xf32>
    %13 = vector.broadcast %12 : vector<1x1024xf32> to vector<8x1024xf32>
    %14 = arith.addf %11, %13 : vector<8x1024xf32>
    %cst_11 = arith.constant 0.000000e+00 : f32
    %15 = vector.broadcast %cst_11 : f32 to vector<8x1024xf32>
    %16 = arith.subf %15, %14 : vector<8x1024xf32>
    %17 = math.exp %16 : vector<8x1024xf32>
    %cst_12 = arith.constant 1.000000e+00 : f32
    %18 = vector.broadcast %cst_12 : f32 to vector<8x1024xf32>
    %19 = arith.addf %18, %17 : vector<8x1024xf32>
    %20 = tpu.reciprocal %19 {approx = true} : vector<8x1024xf32> -> vector<8x1024xf32>
    %21 = arith.truncf %20 : vector<8x1024xf32> to vector<8x1024xbf16>
    %c0_13 = arith.constant 0 : index
    %c0_14 = arith.constant 0 : index
    %22 = vector.load %arg6[%c0_13, %c0_14] : memref<8x1024xbf16, #tpu.memory_space<vmem>>, vector<8x1024xbf16>
    tpu.vector_store %arg6[%c0_13, %c0_14], %21 {strides = array<i32>} : memref<8x1024xbf16, #tpu.memory_space<vmem>>, vector<8x1024xbf16>,
    return
  }
  func.func @transform_0(%arg0: i32) -> (i32, i32) {
    %c0_i32 = arith.constant 0 : i32
    %c0_i32_0 = arith.constant 0 : i32
    return %arg0, %c0_i32 : i32, i32
  }
  func.func @transform_1(%arg0: i32) -> (i32, i32) {
    %c0_i32 = arith.constant 0 : i32
    %c0_i32_0 = arith.constant 0 : i32
    %c0_i32_1 = arith.constant 0 : i32
    return %c0_i32, %c0_i32_0 : i32, i32
  }
  func.func @transform_2(%arg0: i32) -> (i32, i32) {
    %c0_i32 = arith.constant 0 : i32
    %c0_i32_0 = arith.constant 0 : i32
    %c0_i32_1 = arith.constant 0 : i32
    return %c0_i32, %c0_i32_0 : i32, i32
  }
  func.func @transform_3(%arg0: i32) -> (i32, i32) {
    %c0_i32 = arith.constant 0 : i32
    %c0_i32_0 = arith.constant 0 : i32
    %c0_i32_1 = arith.constant 0 : i32
    return %c0_i32, %c0_i32_0 : i32, i32
  }
  func.func @transform_4(%arg0: i32) -> (i32, i32) {
    %c0_i32 = arith.constant 0 : i32
    %c0_i32_0 = arith.constant 0 : i32
    %c0_i32_1 = arith.constant 0 : i32
    return %c0_i32, %c0_i32_0 : i32, i32
  }
  func.func @transform_5(%arg0: i32) -> (i32, i32) {
    %c0_i32 = arith.constant 0 : i32
    %c0_i32_0 = arith.constant 0 : i32
    return %arg0, %c0_i32 : i32, i32
  }
}

module attributes {stable_mosaic.version = 11 : i64} {
  func.func @_autoencoder_kernel(%arg0: i32, %arg1: memref<8x1024xf32, #tpu.memory_space<vmem>>, %arg2: memref<1024x128xbf16, #tpu.memory_space<vmem>>, %arg3: memref<1x128xf32, #tpu.memory_space<vmem>>, %arg4: memref<128x1024xbf16, #tpu.memory_space<vmem>>, %arg5: memref<1x1024xf32, #tpu.memory_space<vmem>>, %arg6: memref<8x1024xbf16, #tpu.memory_space<vmem>>) attributes {dimension_semantics = [#tpu.dimension_semantics<parallel>], iteration_bounds = array<i64: 1>, scalar_prefetch = 0 : i64, scratch_operands = 0 : i64, tpu.core_type = #tpu.core_type<tc>, window_params = [{transform_indices = @transform_0, window_bounds = array<i64: 8, 1024>}, {pipeline_mode = #tpu.pipeline_mode<synchronous>, transform_indices = @transform_1, window_bounds = array<i64: 1024, 128>}, {pipeline_mode = #tpu.pipeline_mode<synchronous>, transform_indices = @transform_2, window_bounds = array<i64: 1, 128>}, {pipeline_mode = #tpu.pipeline_mode<synchronous>, transform_indices = @transform_3, window_bounds = array<i64: 128, 1024>}, {pipeline_mode = #tpu.pipeline_mode<synchronous>, transform_indices = @transform_4, window_bounds = array<i64: 1, 1024>}, {transform_indices = @transform_5, window_bounds = array<i64: 8, 1024>}]} {
    %c0 = arith.constant 0 : index
    %c0_0 = arith.constant 0 : index
    %0 = vector.load %arg1[%c0, %c0_0] : memref<8x1024xf32, #tpu.memory_space<vmem>>, vector<8x1024xf32>
    %1 = arith.truncf %0 : vector<8x1024xf32> to vector<8x1024xbf16>
    %c0_1 = arith.constant 0 : index
    %c0_2 = arith.constant 0 : index
    %2 = vector.load %arg2[%c0_1, %c0_2] : memref<1024x128xbf16, #tpu.memory_space<vmem>>, vector<1024x128xbf16>
    %cst = arith.constant dense<0.000000e+00> : vector<8x128xf32>
    %3 = tpu.matmul %1, %2, %cst {dimension_numbers = #tpu.dot_dimension_numbers<[1], [0], [0], [1], [0, 0, 1, 1], [], []>} : vector<8x1024xbf16>, vector<1024x128xbf16>, vector<8x128xf32> -> vector<8x128xf32>
    %c0_3 = arith.constant 0 : index
    %c0_4 = arith.constant 0 : index
    %4 = vector.load %arg3[%c0_3, %c0_4] : memref<1x128xf32, #tpu.memory_space<vmem>>, vector<1x128xf32>
    %5 = vector.broadcast %4 : vector<1x128xf32> to vector<8x128xf32>
    %6 = arith.addf %3, %5 : vector<8x128xf32>
    %cst_5 = arith.constant 0.000000e+00 : f32
    %7 = vector.broadcast %cst_5 : f32 to vector<8x128xf32>
    %8 = arith.maximumf %6, %7 : vector<8x128xf32>
    %9 = arith.truncf %8 : vector<8x128xf32> to vector<8x128xbf16>
    %c0_6 = arith.constant 0 : index
    %c0_7 = arith.constant 0 : index
    %10 = vector.load %arg4[%c0_6, %c0_7] : memref<128x1024xbf16, #tpu.memory_space<vmem>>, vector<128x1024xbf16>
    %cst_8 = arith.constant dense<0.000000e+00> : vector<8x1024xf32>
    %11 = tpu.matmul %9, %10, %cst_8 {dimension_numbers = #tpu.dot_dimension_numbers<[1], [0], [0], [1], [0, 0, 1, 1], [], []>} : vector<8x128xbf16>, vector<128x1024xbf16>, vector<8x1024xf32> -> vector<8x1024xf32>
    %c0_9 = arith.constant 0 : index
    %c0_10 = arith.constant 0 : index
    %12 = vector.load %arg5[%c0_9, %c0_10] : memref<1x1024xf32, #tpu.memory_space<vmem>>, vector<1x1024xf32>
    %13 = vector.broadcast %12 : vector<1x1024xf32> to vector<8x1024xf32>
    %14 = arith.addf %11, %13 : vector<8x1024xf32>
    %cst_11 = arith.constant 0.000000e+00 : f32
    %15 = vector.broadcast %cst_11 : f32 to vector<8x1024xf32>
    %16 = arith.subf %15, %14 : vector<8x1024xf32>
    %17 = math.exp %16 : vector<8x1024xf32>
    %cst_12 = arith.constant 1.000000e+00 : f32
    %18 = vector.broadcast %cst_12 : f32 to vector<8x1024xf32>
    %19 = arith.addf %18, %17 : vector<8x1024xf32>
    %20 = tpu.reciprocal %19 {approx = true} : vector<8x1024xf32> -> vector<8x1024xf32>
    %21 = arith.truncf %20 : vector<8x1024xf32> to vector<8x1024xbf16>
    %c0_13 = arith.constant 0 : index
    %c0_14 = arith.constant 0 : index
    %22 = vector.load %arg6[%c0_13, %c0_14] : memref<8x1024xbf16, #tpu.memory_space<vmem>>, vector<8x1024xbf16>
    tpu.vector_store %arg6[%c0_13, %c0_14], %21 {strides = array<i32>} : memref<8x1024xbf16, #tpu.memory_space<vmem>>, vector<8x1024xbf16>,
    return
  }
  func.func @transform_0(%arg0: i32) -> (i32, i32) {
    %c0_i32 = arith.constant 0 : i32
    %c0_i32_0 = arith.constant 0 : i32
    return %arg0, %c0_i32 : i32, i32
  }
  func.func @transform_1(%arg0: i32) -> (i32, i32) {
    %c0_i32 = arith.constant 0 : i32
    %c0_i32_0 = arith.constant 0 : i32
    %c0_i32_1 = arith.constant 0 : i32
    return %c0_i32, %c0_i32_0 : i32, i32
  }
  func.func @transform_2(%arg0: i32) -> (i32, i32) {
    %c0_i32 = arith.constant 0 : i32
    %c0_i32_0 = arith.constant 0 : i32
    %c0_i32_1 = arith.constant 0 : i32
    return %c0_i32, %c0_i32_0 : i32, i32
  }
  func.func @transform_3(%arg0: i32) -> (i32, i32) {
    %c0_i32 = arith.constant 0 : i32
    %c0_i32_0 = arith.constant 0 : i32
    %c0_i32_1 = arith.constant 0 : i32
    return %c0_i32, %c0_i32_0 : i32, i32
  }
  func.func @transform_4(%arg0: i32) -> (i32, i32) {
    %c0_i32 = arith.constant 0 : i32
    %c0_i32_0 = arith.constant 0 : i32
    %c0_i32_1 = arith.constant 0 : i32
    return %c0_i32, %c0_i32_0 : i32, i32
  }
  func.func @transform_5(%arg0: i32) -> (i32, i32) {
    %c0_i32 = arith.constant 0 : i32
    %c0_i32_0 = arith.constant 0 : i32
    return %arg0, %c0_i32 : i32, i32
  }
}

</mosaic_0001>

<llo_original>
// kernel: tpu_custom_call.1
$region0: #{tpu_custom_call.1}
  #allocation0 [shape = 'u32[]', space=smem, size = 0x4, offset = 0x4, fixed_abs, tag = 'smem constant byte address 0x4 - core index']
  #allocation1 [shape = 'u32[72,128]{1,0:T(1,128)}', space=vmem, size = 0x9000, scoped, tag = 'internal scratch']
  %s0 = inlined_call_operand.hbm [shape: f32[8,1024], index: 0, kind: input, shape index: {}]
  %s1 = inlined_call_operand.hbm [shape: bf16[1024,128], index: 1, kind: input, shape index: {}]
  %s2 = inlined_call_operand.vmem [shape: f32[1,128], index: 2, kind: input, shape index: {}]
  %s3 = inlined_call_operand.hbm [shape: bf16[128,1024], index: 3, kind: input, shape index: {}]
  %s4 = inlined_call_operand.hbm [shape: f32[1,1024], index: 4, kind: input, shape index: {}]
  %s5 = inlined_call_operand.hbm [shape: bf16[8,1024], index: 5, kind: output, shape index: {}]
  %s6 = sld [smem:[#allocation0]]
  $region46: #{tpu_custom_call.1} parent=0
    _
  %s8 = ssub.s32 1, %s6
  %s9 = scalar_select 0, %s8, %s6
  $region1: #{tpu_custom_call.1} parent=0
    #allocation2 [shape = 'u8[32768]{0}', space=vmem, size = 0x8000, scoped, tag = 'input window, operand 0, single buffered']
    #allocation3 [shape = 's32[1]{0}', space=sflag, size = 0x4, scoped, tag = 'scoped memory for tpu_custom_call.1']
    #allocation4 [shape = 's32[1]{0}', space=sflag, size = 0x4, scoped, tag = 'scoped memory for tpu_custom_call.1']
    #allocation5 [shape = 'u8[262144]{0}', space=vmem, size = 0x40000, scoped, tag = 'input window, operand 1, single buffered']
    #allocation6 [shape = 's32[1]{0}', space=sflag, size = 0x4, scoped, tag = 'scoped memory for tpu_custom_call.1']
    #allocation7 [shape = 'u8[262144]{0}', space=vmem, size = 0x40000, scoped, tag = 'input window, operand 3, single buffered']
    #allocation8 [shape = 'u8[4096]{0}', space=vmem, size = 0x1000, scoped, tag = 'input window, operand 4, single buffered']
    #allocation9 [shape = 's32[1]{0}', space=sflag, size = 0x4, scoped, tag = 'scoped memory for tpu_custom_call.1']
    #allocation10 [shape = 'u8[16384]{0}', space=vmem, size = 0x4000, scoped, tag = 'output window, operand 0, single buffered']
    %10 = vsyncpa [#allocation3], 0
    %11 = vsyncpa [#allocation6], 0
    %12 = vsyncpa [#allocation9], 0
    %13 = vsyncpa [#allocation4], 0
    // Predicated region
    $region2: #{tpu_custom_call.1} parent=1 // pred_check
      _
    $region3: #{tpu_custom_call.1} parent=1 // pred_check_branch
      %15 = sbr.rel (0) target = $region5
    $region4: #{tpu_custom_call.1} parent=1 // pred_region
      %17 = vsyncadd [#allocation3], 0
      %s19 = sshll.u32 %s0, 4
      %s20 = int_to_ptr.hbm [resolvable:$true] %s19
      %s21 = sshll.u32 [#allocation2], 4
      %s22 = int_to_ptr.vmem [resolvable:$true] %s21
      %24 = dma.hbm_to_vmem [thread:$0]  %s20, 1024, %s22, [#allocation3]
    $region5: #{tpu_custom_call.1} parent=1 // pred_fallthru
      _
    // Predicated region
    $region6: #{tpu_custom_call.1} parent=1 // pred_check
      _
    $region7: #{tpu_custom_call.1} parent=1 // pred_check_branch
      %26 = sbr.rel (0) target = $region9
    $region8: #{tpu_custom_call.1} parent=1 // pred_region
      %28 = vsyncadd [#allocation6], 0
      %s29 = sshll.u32 %s1, 4
      %s30 = int_to_ptr.hbm [resolvable:$true] %s29
      %s31 = sshll.u32 [#allocation5], 4
      %s32 = int_to_ptr.vmem [resolvable:$true] %s31
      %37 = dma.hbm_to_vmem [thread:$0]  %s30, 8192, %s32, [#allocation6], 64, 64, 4
    $region9: #{tpu_custom_call.1} parent=1 // pred_fallthru
      _
    // Predicated region
    $region10: #{tpu_custom_call.1} parent=1 // pred_check
      _
    $region11: #{tpu_custom_call.1} parent=1 // pred_check_branch
      %39 = sbr.rel (0) target = $region13
    $region12: #{tpu_custom_call.1} parent=1 // pred_region
      _
    $region13: #{tpu_custom_call.1} parent=1 // pred_fallthru
      _
    // Predicated region
    $region14: #{tpu_custom_call.1} parent=1 // pred_check
      _
    $region15: #{tpu_custom_call.1} parent=1 // pred_check_branch
      %41 = sbr.rel (0) target = $region17
    $region16: #{tpu_custom_call.1} parent=1 // pred_region
      %43 = vsyncadd [#allocation6], 0
      %s44 = sshll.u32 %s3, 4
      %s45 = int_to_ptr.hbm [resolvable:$true] %s44
      %s46 = sshll.u32 [#allocation7], 4
      %s47 = int_to_ptr.vmem [resolvable:$true] %s46
      %52 = dma.hbm_to_vmem [thread:$0]  %s45, 8192, %s47, [#allocation6], 512, 512, 32
    $region17: #{tpu_custom_call.1} parent=1 // pred_fallthru
      _
    // Predicated region
    $region18: #{tpu_custom_call.1} parent=1 // pred_check
      _
    $region19: #{tpu_custom_call.1} parent=1 // pred_check_branch
      %54 = sbr.rel (0) target = $region21
    $region20: #{tpu_custom_call.1} parent=1 // pred_region
      %56 = vsyncadd [#allocation9], 0
      %s58 = sshll.u32 %s4, 4
      %s59 = int_to_ptr.hbm [resolvable:$true] %s58
      %s60 = sshll.u32 [#allocation8], 4
      %s61 = int_to_ptr.vmem [resolvable:$true] %s60
      %63 = dma.hbm_to_vmem [thread:$0]  %s59, 128, %s61, [#allocation9]
    $region21: #{tpu_custom_call.1} parent=1 // pred_fallthru
      _
    // Predicated region
    $region22: #{tpu_custom_call.1} parent=1 // pred_check
      _
    $region23: #{tpu_custom_call.1} parent=1 // pred_check_branch
      %65 = sbr.rel (0) target = $region25
    $region24: #{tpu_custom_call.1} parent=1 // pred_region
      %67 = dma.done [#allocation3], 1024
    $region25: #{tpu_custom_call.1} parent=1 // pred_fallthru
      _
    // Predicated region
    $region26: #{tpu_custom_call.1} parent=1 // pred_check
      _
    $region27: #{tpu_custom_call.1} parent=1 // pred_check_branch
      %69 = sbr.rel (0) target = $region29
    $region28: #{tpu_custom_call.1} parent=1 // pred_region
      %71 = dma.done [#allocation6], 8192
    $region29: #{tpu_custom_call.1} parent=1 // pred_fallthru
      _
    // Predicated region
    $region30: #{tpu_custom_call.1} parent=1 // pred_check
      _
    $region31: #{tpu_custom_call.1} parent=1 // pred_check_branch
      %73 = sbr.rel (0) target = $region33
    $region32: #{tpu_custom_call.1} parent=1 // pred_region
      %75 = dma.done [#allocation6], 8192
    $region33: #{tpu_custom_call.1} parent=1 // pred_fallthru
      _
    // Predicated region
    $region34: #{tpu_custom_call.1} parent=1 // pred_check
      _
    $region35: #{tpu_custom_call.1} parent=1 // pred_check_branch
      %77 = sbr.rel (0) target = $region37
    $region36: #{tpu_custom_call.1} parent=1 // pred_region
      %79 = dma.done [#allocation9], 128
    $region37: #{tpu_custom_call.1} parent=1 // pred_fallthru
      _
    %v80 = vld [vmem:[#allocation2] sm:$0xff]
    %v81 = vld [vmem:[#allocation2 + $0x8] sm:$0xff]
    %v82 = vld [vmem:[#allocation2 + $0x10] sm:$0xff]
    %v83 = vld [vmem:[#allocation2 + $0x18] sm:$0xff]
    %v84 = vld [vmem:[#allocation2 + $0x20] sm:$0xff]
    %v85 = vld [vmem:[#allocation2 + $0x28] sm:$0xff]
    %v86 = vld [vmem:[#allocation2 + $0x30] sm:$0xff]
    %v87 = vld [vmem:[#allocation2 + $0x38] sm:$0xff]
    %v88 = vpack.c.bf16 %v80, %v80
    %v89 = vpack.c.bf16 %v81, %v81
    %v90 = vpack.c.bf16 %v82, %v82
    %v91 = vpack.c.bf16 %v83, %v83
    %v92 = vpack.c.bf16 %v84, %v84
    %v93 = vpack.c.bf16 %v85, %v85
    %v94 = vpack.c.bf16 %v86, %v86
    %v95 = vpack.c.bf16 %v87, %v87
    %v96 = vld [vmem:[#allocation5] sm:$0xf]
    %v97 = vld [vmem:[#allocation5 + $0x4] sm:$0xf]
    %v98 = vld [vmem:[#allocation5 + $0x8] sm:$0xf]
    %v99 = vld [vmem:[#allocation5 + $0xc] sm:$0xf]
    %v100 = vld [vmem:[#allocation5 + $0x10] sm:$0xf]
    %v101 = vld [vmem:[#allocation5 + $0x14] sm:$0xf]
    %v102 = vld [vmem:[#allocation5 + $0x18] sm:$0xf]
    %v103 = vld [vmem:[#allocation5 + $0x1c] sm:$0xf]
    %v104 = vld [vmem:[#allocation5 + $0x20] sm:$0xf]
    %v105 = vld [vmem:[#allocation5 + $0x24] sm:$0xf]
    %v106 = vld [vmem:[#allocation5 + $0x28] sm:$0xf]
    %v107 = vld [vmem:[#allocation5 + $0x2c] sm:$0xf]
    %v108 = vld [vmem:[#allocation5 + $0x30] sm:$0xf]
    %v109 = vld [vmem:[#allocation5 + $0x34] sm:$0xf]
    %v110 = vld [vmem:[#allocation5 + $0x38] sm:$0xf]
    %v111 = vld [vmem:[#allocation5 + $0x3c] sm:$0xf]
    %v112 = vld [vmem:[#allocation5 + $0x40] sm:$0xf]
    %v113 = vld [vmem:[#allocation5 + $0x44] sm:$0xf]
    %v114 = vld [vmem:[#allocation5 + $0x48] sm:$0xf]
    %v115 = vld [vmem:[#allocation5 + $0x4c] sm:$0xf]
    %v116 = vld [vmem:[#allocation5 + $0x50] sm:$0xf]
    %v117 = vld [vmem:[#allocation5 + $0x54] sm:$0xf]
    %v118 = vld [vmem:[#allocation5 + $0x58] sm:$0xf]
    %v119 = vld [vmem:[#allocation5 + $0x5c] sm:$0xf]
    %v120 = vld [vmem:[#allocation5 + $0x60] sm:$0xf]
    %v121 = vld [vmem:[#allocation5 + $0x64] sm:$0xf]
    %v122 = vld [vmem:[#allocation5 + $0x68] sm:$0xf]
    %v123 = vld [vmem:[#allocation5 + $0x6c] sm:$0xf]
    %v124 = vld [vmem:[#allocation5 + $0x70] sm:$0xf]
    %v125 = vld [vmem:[#allocation5 + $0x74] sm:$0xf]
    %v126 = vld [vmem:[#allocation5 + $0x78] sm:$0xf]
    %v127 = vld [vmem:[#allocation5 + $0x7c] sm:$0xf]
    %v128 = vld [vmem:[#allocation5 + $0x80] sm:$0xf]
    %v129 = vld [vmem:[#allocation5 + $0x84] sm:$0xf]
    %v130 = vld [vmem:[#allocation5 + $0x88] sm:$0xf]
    %v131 = vld [vmem:[#allocation5 + $0x8c] sm:$0xf]
    %v132 = vld [vmem:[#allocation5 + $0x90] sm:$0xf]
    %v133 = vld [vmem:[#allocation5 + $0x94] sm:$0xf]
    %v134 = vld [vmem:[#allocation5 + $0x98] sm:$0xf]
    %v135 = vld [vmem:[#allocation5 + $0x9c] sm:$0xf]
    %v136 = vld [vmem:[#allocation5 + $0xa0] sm:$0xf]
    %v137 = vld [vmem:[#allocation5 + $0xa4] sm:$0xf]
    %v138 = vld [vmem:[#allocation5 + $0xa8] sm:$0xf]
    %v139 = vld [vmem:[#allocation5 + $0xac] sm:$0xf]
    %v140 = vld [vmem:[#allocation5 + $0xb0] sm:$0xf]
    %v141 = vld [vmem:[#allocation5 + $0xb4] sm:$0xf]
    %v142 = vld [vmem:[#allocation5 + $0xb8] sm:$0xf]
    %v143 = vld [vmem:[#allocation5 + $0xbc] sm:$0xf]
    %v144 = vld [vmem:[#allocation5 + $0xc0] sm:$0xf]
    %v145 = vld [vmem:[#allocation5 + $0xc4] sm:$0xf]
    %v146 = vld [vmem:[#allocation5 + $0xc8] sm:$0xf]
    %v147 = vld [vmem:[#allocation5 + $0xcc] sm:$0xf]
    %v148 = vld [vmem:[#allocation5 + $0xd0] sm:$0xf]
    %v149 = vld [vmem:[#allocation5 + $0xd4] sm:$0xf]
    %v150 = vld [vmem:[#allocation5 + $0xd8] sm:$0xf]
    %v151 = vld [vmem:[#allocation5 + $0xdc] sm:$0xf]
    %v152 = vld [vmem:[#allocation5 + $0xe0] sm:$0xf]
    %v153 = vld [vmem:[#allocation5 + $0xe4] sm:$0xf]
    %v154 = vld [vmem:[#allocation5 + $0xe8] sm:$0xf]
    %v155 = vld [vmem:[#allocation5 + $0xec] sm:$0xf]
    %v156 = vld [vmem:[#allocation5 + $0xf0] sm:$0xf]
    %v157 = vld [vmem:[#allocation5 + $0xf4] sm:$0xf]
    %v158 = vld [vmem:[#allocation5 + $0xf8] sm:$0xf]
    %v159 = vld [vmem:[#allocation5 + $0xfc] sm:$0xf]
    %v160 = vld [vmem:[#allocation5 + $0x100] sm:$0xf]
    %v161 = vld [vmem:[#allocation5 + $0x104] sm:$0xf]
    %v162 = vld [vmem:[#allocation5 + $0x108] sm:$0xf]
    %v163 = vld [vmem:[#allocation5 + $0x10c] sm:$0xf]
    %v164 = vld [vmem:[#allocation5 + $0x110] sm:$0xf]
    %v165 = vld [vmem:[#allocation5 + $0x114] sm:$0xf]
    %v166 = vld [vmem:[#allocation5 + $0x118] sm:$0xf]
    %v167 = vld [vmem:[#allocation5 + $0x11c] sm:$0xf]
    %v168 = vld [vmem:[#allocation5 + $0x120] sm:$0xf]
    %v169 = vld [vmem:[#allocation5 + $0x124] sm:$0xf]
    %v170 = vld [vmem:[#allocation5 + $0x128] sm:$0xf]
    %v171 = vld [vmem:[#allocation5 + $0x12c] sm:$0xf]
    %v172 = vld [vmem:[#allocation5 + $0x130] sm:$0xf]
    %v173 = vld [vmem:[#allocation5 + $0x134] sm:$0xf]
    %v174 = vld [vmem:[#allocation5 + $0x138] sm:$0xf]
    %v175 = vld [vmem:[#allocation5 + $0x13c] sm:$0xf]
    %v176 = vld [vmem:[#allocation5 + $0x140] sm:$0xf]
    %v177 = vld [vmem:[#allocation5 + $0x144] sm:$0xf]
    %v178 = vld [vmem:[#allocation5 + $0x148] sm:$0xf]
    %v179 = vld [vmem:[#allocation5 + $0x14c] sm:$0xf]
    %v180 = vld [vmem:[#allocation5 + $0x150] sm:$0xf]
    %v181 = vld [vmem:[#allocation5 + $0x154] sm:$0xf]
    %v182 = vld [vmem:[#allocation5 + $0x158] sm:$0xf]
    %v183 = vld [vmem:[#allocation5 + $0x15c] sm:$0xf]
    %v184 = vld [vmem:[#allocation5 + $0x160] sm:$0xf]
    %v185 = vld [vmem:[#allocation5 + $0x164] sm:$0xf]
    %v186 = vld [vmem:[#allocation5 + $0x168] sm:$0xf]
    %v187 = vld [vmem:[#allocation5 + $0x16c] sm:$0xf]
    %v188 = vld [vmem:[#allocation5 + $0x170] sm:$0xf]
    %v189 = vld [vmem:[#allocation5 + $0x174] sm:$0xf]
    %v190 = vld [vmem:[#allocation5 + $0x178] sm:$0xf]
    %v191 = vld [vmem:[#allocation5 + $0x17c] sm:$0xf]
    %v192 = vld [vmem:[#allocation5 + $0x180] sm:$0xf]
    %v193 = vld [vmem:[#allocation5 + $0x184] sm:$0xf]
    %v194 = vld [vmem:[#allocation5 + $0x188] sm:$0xf]
    %v195 = vld [vmem:[#allocation5 + $0x18c] sm:$0xf]
    %v196 = vld [vmem:[#allocation5 + $0x190] sm:$0xf]
    %v197 = vld [vmem:[#allocation5 + $0x194] sm:$0xf]
    %v198 = vld [vmem:[#allocation5 + $0x198] sm:$0xf]
    %v199 = vld [vmem:[#allocation5 + $0x19c] sm:$0xf]
    %v200 = vld [vmem:[#allocation5 + $0x1a0] sm:$0xf]
    %v201 = vld [vmem:[#allocation5 + $0x1a4] sm:$0xf]
    %v202 = vld [vmem:[#allocation5 + $0x1a8] sm:$0xf]
    %v203 = vld [vmem:[#allocation5 + $0x1ac] sm:$0xf]
    %v204 = vld [vmem:[#allocation5 + $0x1b0] sm:$0xf]
    %v205 = vld [vmem:[#allocation5 + $0x1b4] sm:$0xf]
    %v206 = vld [vmem:[#allocation5 + $0x1b8] sm:$0xf]
    %v207 = vld [vmem:[#allocation5 + $0x1bc] sm:$0xf]
    %v208 = vld [vmem:[#allocation5 + $0x1c0] sm:$0xf]
    %v209 = vld [vmem:[#allocation5 + $0x1c4] sm:$0xf]
    %v210 = vld [vmem:[#allocation5 + $0x1c8] sm:$0xf]
    %v211 = vld [vmem:[#allocation5 + $0x1cc] sm:$0xf]
    %v212 = vld [vmem:[#allocation5 + $0x1d0] sm:$0xf]
    %v213 = vld [vmem:[#allocation5 + $0x1d4] sm:$0xf]
    %v214 = vld [vmem:[#allocation5 + $0x1d8] sm:$0xf]
    %v215 = vld [vmem:[#allocation5 + $0x1dc] sm:$0xf]
    %v216 = vld [vmem:[#allocation5 + $0x1e0] sm:$0xf]
    %v217 = vld [vmem:[#allocation5 + $0x1e4] sm:$0xf]
    %v218 = vld [vmem:[#allocation5 + $0x1e8] sm:$0xf]
    %v219 = vld [vmem:[#allocation5 + $0x1ec] sm:$0xf]
    %v220 = vld [vmem:[#allocation5 + $0x1f0] sm:$0xf]
    %v221 = vld [vmem:[#allocation5 + $0x1f4] sm:$0xf]
    %v222 = vld [vmem:[#allocation5 + $0x1f8] sm:$0xf]
    %v223 = vld [vmem:[#allocation5 + $0x1fc] sm:$0xf]
    %v224 = vld [vmem:[%s2] sm:$0x1]
    %v226 = vperm.slane %v224, 0
    %v356 = vunpack.c.l.b16 %v96
    %v357 = vunpack.c.l.b16 %v97
    %v358 = vunpack.c.l.b16 %v98
    %v359 = vunpack.c.l.b16 %v99
    %v360 = vunpack.c.l.b16 %v100
    %v361 = vunpack.c.l.b16 %v101
    %v362 = vunpack.c.l.b16 %v102
    %v363 = vunpack.c.l.b16 %v103
    %v364 = vunpack.c.l.b16 %v104
    %v365 = vunpack.c.l.b16 %v105
    %v366 = vunpack.c.l.b16 %v106
    %v367 = vunpack.c.l.b16 %v107
    %v368 = vunpack.c.l.b16 %v108
    %v369 = vunpack.c.l.b16 %v109
    %v370 = vunpack.c.l.b16 %v110
    %v371 = vunpack.c.l.b16 %v111
    %v372 = vunpack.c.l.b16 %v112
    %v373 = vunpack.c.l.b16 %v113
    %v374 = vunpack.c.l.b16 %v114
    %v375 = vunpack.c.l.b16 %v115
    %v376 = vunpack.c.l.b16 %v116
    %v377 = vunpack.c.l.b16 %v117
    %v378 = vunpack.c.l.b16 %v118
    %v379 = vunpack.c.l.b16 %v119
    %v380 = vunpack.c.l.b16 %v120
    %v381 = vunpack.c.l.b16 %v121
    %v382 = vunpack.c.l.b16 %v122
    %v383 = vunpack.c.l.b16 %v123
    %v384 = vunpack.c.l.b16 %v124
    %v385 = vunpack.c.l.b16 %v125
    %v386 = vunpack.c.l.b16 %v126
    %v387 = vunpack.c.l.b16 %v127
    %v388 = vunpack.c.l.b16 %v128
    %v389 = vunpack.c.l.b16 %v129
    %v390 = vunpack.c.l.b16 %v130
    %v391 = vunpack.c.l.b16 %v131
    %v392 = vunpack.c.l.b16 %v132
    %v393 = vunpack.c.l.b16 %v133
    %v394 = vunpack.c.l.b16 %v134
    %v395 = vunpack.c.l.b16 %v135
    %v396 = vunpack.c.l.b16 %v136
    %v397 = vunpack.c.l.b16 %v137
    %v398 = vunpack.c.l.b16 %v138
    %v399 = vunpack.c.l.b16 %v139
    %v400 = vunpack.c.l.b16 %v140
    %v401 = vunpack.c.l.b16 %v141
    %v402 = vunpack.c.l.b16 %v142
    %v403 = vunpack.c.l.b16 %v143
    %v404 = vunpack.c.l.b16 %v144
    %v405 = vunpack.c.l.b16 %v145
    %v406 = vunpack.c.l.b16 %v146
    %v407 = vunpack.c.l.b16 %v147
    %v408 = vunpack.c.l.b16 %v148
    %v409 = vunpack.c.l.b16 %v149
    %v410 = vunpack.c.l.b16 %v150
    %v411 = vunpack.c.l.b16 %v151
    %v412 = vunpack.c.l.b16 %v152
    %v413 = vunpack.c.l.b16 %v153
    %v414 = vunpack.c.l.b16 %v154
    %v415 = vunpack.c.l.b16 %v155
    %v416 = vunpack.c.l.b16 %v156
    %v417 = vunpack.c.l.b16 %v157
    %v418 = vunpack.c.l.b16 %v158
    %v419 = vunpack.c.l.b16 %v159
    %v420 = vunpack.c.l.b16 %v160
    %v421 = vunpack.c.l.b16 %v161
    %v422 = vunpack.c.l.b16 %v162
    %v423 = vunpack.c.l.b16 %v163
    %v424 = vunpack.c.l.b16 %v164
    %v425 = vunpack.c.l.b16 %v165
    %v426 = vunpack.c.l.b16 %v166
    %v427 = vunpack.c.l.b16 %v167
    %v428 = vunpack.c.l.b16 %v168
    %v429 = vunpack.c.l.b16 %v169
    %v430 = vunpack.c.l.b16 %v170
    %v431 = vunpack.c.l.b16 %v171
    %v432 = vunpack.c.l.b16 %v172
    %v433 = vunpack.c.l.b16 %v173
    %v434 = vunpack.c.l.b16 %v174
    %v435 = vunpack.c.l.b16 %v175
    %v436 = vunpack.c.l.b16 %v176
    %v437 = vunpack.c.l.b16 %v177
    %v438 = vunpack.c.l.b16 %v178
    %v439 = vunpack.c.l.b16 %v179
    %v440 = vunpack.c.l.b16 %v180
    %v441 = vunpack.c.l.b16 %v181
    %v442 = vunpack.c.l.b16 %v182
    %v443 = vunpack.c.l.b16 %v183
    %v444 = vunpack.c.l.b16 %v184
    %v445 = vunpack.c.l.b16 %v185
    %v446 = vunpack.c.l.b16 %v186
    %v447 = vunpack.c.l.b16 %v187
    %v448 = vunpack.c.l.b16 %v188
    %v449 = vunpack.c.l.b16 %v189
    %v450 = vunpack.c.l.b16 %v190
    %v451 = vunpack.c.l.b16 %v191
    %v452 = vunpack.c.l.b16 %v192
    %v453 = vunpack.c.l.b16 %v193
    %v454 = vunpack.c.l.b16 %v194
    %v455 = vunpack.c.l.b16 %v195
    %v456 = vunpack.c.l.b16 %v196
    %v457 = vunpack.c.l.b16 %v197
    %v458 = vunpack.c.l.b16 %v198
    %v459 = vunpack.c.l.b16 %v199
    %v460 = vunpack.c.l.b16 %v200
    %v461 = vunpack.c.l.b16 %v201
    %v462 = vunpack.c.l.b16 %v202
    %v463 = vunpack.c.l.b16 %v203
    %v464 = vunpack.c.l.b16 %v204
    %v465 = vunpack.c.l.b16 %v205
    %v466 = vunpack.c.l.b16 %v206
    %v467 = vunpack.c.l.b16 %v207
    %v468 = vunpack.c.l.b16 %v208
    %v469 = vunpack.c.l.b16 %v209
    %v470 = vunpack.c.l.b16 %v210
    %v471 = vunpack.c.l.b16 %v211
    %v472 = vunpack.c.l.b16 %v212
    %v473 = vunpack.c.l.b16 %v213
    %v474 = vunpack.c.l.b16 %v214
    %v475 = vunpack.c.l.b16 %v215
    %v476 = vunpack.c.l.b16 %v216
    %v477 = vunpack.c.l.b16 %v217
    %v478 = vunpack.c.l.b16 %v218
    %v479 = vunpack.c.l.b16 %v219
    %v480 = vunpack.c.l.b16 %v220
    %v481 = vunpack.c.l.b16 %v221
    %v482 = vunpack.c.l.b16 %v222
    %v483 = vunpack.c.l.b16 %v223
    %v484 = vpack.c.b16 %v357, %v356
    %v485 = vpack.c.b16 %v359, %v358
    %v486 = vpack.c.b16 %v361, %v360
    %v487 = vpack.c.b16 %v363, %v362
    %v488 = vpack.c.b16 %v365, %v364
    %v489 = vpack.c.b16 %v367, %v366
    %v490 = vpack.c.b16 %v369, %v368
    %v491 = vpack.c.b16 %v371, %v370
    %v492 = vpack.c.b16 %v373, %v372
    %v493 = vpack.c.b16 %v375, %v374
    %v494 = vpack.c.b16 %v377, %v376
    %v495 = vpack.c.b16 %v379, %v378
    %v496 = vpack.c.b16 %v381, %v380
    %v497 = vpack.c.b16 %v383, %v382
    %v498 = vpack.c.b16 %v385, %v384
    %v499 = vpack.c.b16 %v387, %v386
    %v500 = vpack.c.b16 %v389, %v388
    %v501 = vpack.c.b16 %v391, %v390
    %v502 = vpack.c.b16 %v393, %v392
    %v503 = vpack.c.b16 %v395, %v394
    %v504 = vpack.c.b16 %v397, %v396
    %v505 = vpack.c.b16 %v399, %v398
    %v506 = vpack.c.b16 %v401, %v400
    %v507 = vpack.c.b16 %v403, %v402
    %v508 = vpack.c.b16 %v405, %v404
    %v509 = vpack.c.b16 %v407, %v406
    %v510 = vpack.c.b16 %v409, %v408
    %v511 = vpack.c.b16 %v411, %v410
    %v512 = vpack.c.b16 %v413, %v412
    %v513 = vpack.c.b16 %v415, %v414
    %v514 = vpack.c.b16 %v417, %v416
    %v515 = vpack.c.b16 %v419, %v418
    %v516 = vpack.c.b16 %v421, %v420
    %v517 = vpack.c.b16 %v423, %v422
    %v518 = vpack.c.b16 %v425, %v424
    %v519 = vpack.c.b16 %v427, %v426
    %v520 = vpack.c.b16 %v429, %v428
    %v521 = vpack.c.b16 %v431, %v430
    %v522 = vpack.c.b16 %v433, %v432
    %v523 = vpack.c.b16 %v435, %v434
    %v524 = vpack.c.b16 %v437, %v436
    %v525 = vpack.c.b16 %v439, %v438
    %v526 = vpack.c.b16 %v441, %v440
    %v527 = vpack.c.b16 %v443, %v442
    %v528 = vpack.c.b16 %v445, %v444
    %v529 = vpack.c.b16 %v447, %v446
    %v530 = vpack.c.b16 %v449, %v448
    %v531 = vpack.c.b16 %v451, %v450
    %v532 = vpack.c.b16 %v453, %v452
    %v533 = vpack.c.b16 %v455, %v454
    %v534 = vpack.c.b16 %v457, %v456
    %v535 = vpack.c.b16 %v459, %v458
    %v536 = vpack.c.b16 %v461, %v460
    %v537 = vpack.c.b16 %v463, %v462
    %v538 = vpack.c.b16 %v465, %v464
    %v539 = vpack.c.b16 %v467, %v466
    %v540 = vpack.c.b16 %v469, %v468
    %v541 = vpack.c.b16 %v471, %v470
    %v542 = vpack.c.b16 %v473, %v472
    %v543 = vpack.c.b16 %v475, %v474
    %v544 = vpack.c.b16 %v477, %v476
    %v545 = vpack.c.b16 %v479, %v478
    %v546 = vpack.c.b16 %v481, %v480
    %v547 = vpack.c.b16 %v483, %v482
    %612 = vmatpush.bf16.msra.mxu0 %v491
    %613 = vmatpush.bf16.msra.mxu0 %v490
    %614 = vmatpush.bf16.msra.mxu0 %v489
    %615 = vmatpush.bf16.msra.mxu0 %v488
    %616 = vmatpush.bf16.msra.mxu0 %v487
    %617 = vmatpush.bf16.msra.mxu0 %v486
    %618 = vmatpush.bf16.msra.mxu0 %v485
    %619 = vmatpush.bf16.msra.mxu0 %v484
    %620 = vmatmul.bf16.gmra.mxu0 %v88
    %v621 = vpop.f32.mrf.mxu0
    %v622 = vadd.f32 %v226, %v621
    %v623 = vpop.f32.mrf.mxu0
    %624 = vdwg.mxu0
    %625 = vmatpush.bf16.msra.mxu0 %v499
    %626 = vmatpush.bf16.msra.mxu0 %v498
    %627 = vmatpush.bf16.msra.mxu0 %v497
    %628 = vmatpush.bf16.msra.mxu0 %v496
    %629 = vmatpush.bf16.msra.mxu0 %v495
    %630 = vmatpush.bf16.msra.mxu0 %v494
    %631 = vmatpush.bf16.msra.mxu0 %v493
    %632 = vmatpush.bf16.msra.mxu0 %v492
    %633 = vmatmul.bf16.gmra.mxu0 %v89
    %v634 = vpop.f32.mrf.mxu0
    %v635 = vadd.f32 %v622, %v634
    %v636 = vpop.f32.mrf.mxu0
    %637 = vdwg.mxu0
    %638 = vmatpush.bf16.msra.mxu0 %v507
    %639 = vmatpush.bf16.msra.mxu0 %v506
    %640 = vmatpush.bf16.msra.mxu0 %v505
    %641 = vmatpush.bf16.msra.mxu0 %v504
    %642 = vmatpush.bf16.msra.mxu0 %v503
    %643 = vmatpush.bf16.msra.mxu0 %v502
    %644 = vmatpush.bf16.msra.mxu0 %v501
    %645 = vmatpush.bf16.msra.mxu0 %v500
    %646 = vmatmul.bf16.gmra.mxu0 %v90
    %v647 = vpop.f32.mrf.mxu0
    %v648 = vadd.f32 %v635, %v647
    %v649 = vpop.f32.mrf.mxu0
    %650 = vdwg.mxu0
    %651 = vmatpush.bf16.msra.mxu0 %v515
    %652 = vmatpush.bf16.msra.mxu0 %v514
    %653 = vmatpush.bf16.msra.mxu0 %v513
    %654 = vmatpush.bf16.msra.mxu0 %v512
    %655 = vmatpush.bf16.msra.mxu0 %v511
    %656 = vmatpush.bf16.msra.mxu0 %v510
    %657 = vmatpush.bf16.msra.mxu0 %v509
    %658 = vmatpush.bf16.msra.mxu0 %v508
    %659 = vmatmul.bf16.gmra.mxu0 %v91
    %v660 = vpop.f32.mrf.mxu0
    %v661 = vadd.f32 %v648, %v660
    %v662 = vpop.f32.mrf.mxu0
    %663 = vdwg.mxu0
    %664 = vmatpush.bf16.msra.mxu0 %v523
    %665 = vmatpush.bf16.msra.mxu0 %v522
    %666 = vmatpush.bf16.msra.mxu0 %v521
    %667 = vmatpush.bf16.msra.mxu0 %v520
    %668 = vmatpush.bf16.msra.mxu0 %v519
    %669 = vmatpush.bf16.msra.mxu0 %v518
    %670 = vmatpush.bf16.msra.mxu0 %v517
    %671 = vmatpush.bf16.msra.mxu0 %v516
    %672 = vmatmul.bf16.gmra.mxu0 %v92
    %v673 = vpop.f32.mrf.mxu0
    %v674 = vadd.f32 %v661, %v673
    %v675 = vpop.f32.mrf.mxu0
    %676 = vdwg.mxu0
    %677 = vmatpush.bf16.msra.mxu0 %v531
    %678 = vmatpush.bf16.msra.mxu0 %v530
    %679 = vmatpush.bf16.msra.mxu0 %v529
    %680 = vmatpush.bf16.msra.mxu0 %v528
    %681 = vmatpush.bf16.msra.mxu0 %v527
    %682 = vmatpush.bf16.msra.mxu0 %v526
    %683 = vmatpush.bf16.msra.mxu0 %v525
    %684 = vmatpush.bf16.msra.mxu0 %v524
    %685 = vmatmul.bf16.gmra.mxu0 %v93
    %v686 = vpop.f32.mrf.mxu0
    %v687 = vadd.f32 %v674, %v686
    %v688 = vpop.f32.mrf.mxu0
    %689 = vdwg.mxu0
    %690 = vmatpush.bf16.msra.mxu0 %v539
    %691 = vmatpush.bf16.msra.mxu0 %v538
    %692 = vmatpush.bf16.msra.mxu0 %v537
    %693 = vmatpush.bf16.msra.mxu0 %v536
    %694 = vmatpush.bf16.msra.mxu0 %v535
    %695 = vmatpush.bf16.msra.mxu0 %v534
    %696 = vmatpush.bf16.msra.mxu0 %v533
    %697 = vmatpush.bf16.msra.mxu0 %v532
    %698 = vmatmul.bf16.gmra.mxu0 %v94
    %v699 = vpop.f32.mrf.mxu0
    %v700 = vadd.f32 %v687, %v699
    %v701 = vpop.f32.mrf.mxu0
    %702 = vdwg.mxu0
    %703 = vmatpush.bf16.msra.mxu0 %v547
    %704 = vmatpush.bf16.msra.mxu0 %v546
    %705 = vmatpush.bf16.msra.mxu0 %v545
    %706 = vmatpush.bf16.msra.mxu0 %v544
    %707 = vmatpush.bf16.msra.mxu0 %v543
    %708 = vmatpush.bf16.msra.mxu0 %v542
    %709 = vmatpush.bf16.msra.mxu0 %v541
    %710 = vmatpush.bf16.msra.mxu0 %v540
    %711 = vmatmul.bf16.gmra.mxu0 %v95
    %v712 = vpop.f32.mrf.mxu0
    %v713 = vadd.f32 %v700, %v712
    %v714 = vpop.f32.mrf.mxu0
    %715 = vdwg.mxu0
    %v716 = vmax.f32 %v713, 0.0
    %v717 = vpack.c.bf16 %v716, %v716
    %v718 = vld [vmem:[#allocation7] sm:$0xff]
    %v719 = vld [vmem:[#allocation7 + $0x8] sm:$0xff]
    %v720 = vld [vmem:[#allocation7 + $0x10] sm:$0xff]
    %v721 = vld [vmem:[#allocation7 + $0x18] sm:$0xff]
    %v722 = vld [vmem:[#allocation7 + $0x20] sm:$0xff]
    %v723 = vld [vmem:[#allocation7 + $0x28] sm:$0xff]
    %v724 = vld [vmem:[#allocation7 + $0x30] sm:$0xff]
    %v725 = vld [vmem:[#allocation7 + $0x38] sm:$0xff]
    %v726 = vld [vmem:[#allocation7 + $0x40] sm:$0xff]
    %v727 = vld [vmem:[#allocation7 + $0x48] sm:$0xff]
    %v728 = vld [vmem:[#allocation7 + $0x50] sm:$0xff]
    %v729 = vld [vmem:[#allocation7 + $0x58] sm:$0xff]
    %v730 = vld [vmem:[#allocation7 + $0x60] sm:$0xff]
    %v731 = vld [vmem:[#allocation7 + $0x68] sm:$0xff]
    %v732 = vld [vmem:[#allocation7 + $0x70] sm:$0xff]
    %v733 = vld [vmem:[#allocation7 + $0x78] sm:$0xff]
    %v734 = vld [vmem:[#allocation7 + $0x80] sm:$0xff]
    %v735 = vld [vmem:[#allocation7 + $0x88] sm:$0xff]
    %v736 = vld [vmem:[#allocation7 + $0x90] sm:$0xff]
    %v737 = vld [vmem:[#allocation7 + $0x98] sm:$0xff]
    %v738 = vld [vmem:[#allocation7 + $0xa0] sm:$0xff]
    %v739 = vld [vmem:[#allocation7 + $0xa8] sm:$0xff]
    %v740 = vld [vmem:[#allocation7 + $0xb0] sm:$0xff]
    %v741 = vld [vmem:[#allocation7 + $0xb8] sm:$0xff]
    %v742 = vld [vmem:[#allocation7 + $0xc0] sm:$0xff]
    %v743 = vld [vmem:[#allocation7 + $0xc8] sm:$0xff]
    %v744 = vld [vmem:[#allocation7 + $0xd0] sm:$0xff]
    %v745 = vld [vmem:[#allocation7 + $0xd8] sm:$0xff]
    %v746 = vld [vmem:[#allocation7 + $0xe0] sm:$0xff]
    %v747 = vld [vmem:[#allocation7 + $0xe8] sm:$0xff]
    %v748 = vld [vmem:[#allocation7 + $0xf0] sm:$0xff]
    %v749 = vld [vmem:[#allocation7 + $0xf8] sm:$0xff]
    %v750 = vld [vmem:[#allocation7 + $0x100] sm:$0xff]
    %v751 = vld [vmem:[#allocation7 + $0x108] sm:$0xff]
    %v752 = vld [vmem:[#allocation7 + $0x110] sm:$0xff]
    %v753 = vld [vmem:[#allocation7 + $0x118] sm:$0xff]
    %v754 = vld [vmem:[#allocation7 + $0x120] sm:$0xff]
    %v755 = vld [vmem:[#allocation7 + $0x128] sm:$0xff]
    %v756 = vld [vmem:[#allocation7 + $0x130] sm:$0xff]
    %v757 = vld [vmem:[#allocation7 + $0x138] sm:$0xff]
    %v758 = vld [vmem:[#allocation7 + $0x140] sm:$0xff]
    %v759 = vld [vmem:[#allocation7 + $0x148] sm:$0xff]
    %v760 = vld [vmem:[#allocation7 + $0x150] sm:$0xff]
    %v761 = vld [vmem:[#allocation7 + $0x158] sm:$0xff]
    %v762 = vld [vmem:[#allocation7 + $0x160] sm:$0xff]
    %v763 = vld [vmem:[#allocation7 + $0x168] sm:$0xff]
    %v764 = vld [vmem:[#allocation7 + $0x170] sm:$0xff]
    %v765 = vld [vmem:[#allocation7 + $0x178] sm:$0xff]
    %v766 = vld [vmem:[#allocation7 + $0x180] sm:$0xff]
    %v767 = vld [vmem:[#allocation7 + $0x188] sm:$0xff]
    %v768 = vld [vmem:[#allocation7 + $0x190] sm:$0xff]
    %v769 = vld [vmem:[#allocation7 + $0x198] sm:$0xff]
    %v770 = vld [vmem:[#allocation7 + $0x1a0] sm:$0xff]
    %v771 = vld [vmem:[#allocation7 + $0x1a8] sm:$0xff]
    %v772 = vld [vmem:[#allocation7 + $0x1b0] sm:$0xff]
    %v773 = vld [vmem:[#allocation7 + $0x1b8] sm:$0xff]
    %v774 = vld [vmem:[#allocation7 + $0x1c0] sm:$0xff]
    %v775 = vld [vmem:[#allocation7 + $0x1c8] sm:$0xff]
    %v776 = vld [vmem:[#allocation7 + $0x1d0] sm:$0xff]
    %v777 = vld [vmem:[#allocation7 + $0x1d8] sm:$0xff]
    %v778 = vld [vmem:[#allocation7 + $0x1e0] sm:$0xff]
    %v779 = vld [vmem:[#allocation7 + $0x1e8] sm:$0xff]
    %v780 = vld [vmem:[#allocation7 + $0x1f0] sm:$0xff]
    %v781 = vld [vmem:[#allocation7 + $0x1f8] sm:$0xff]
    %v782 = vld [vmem:[#allocation8] sm:$0xff]
    %v784 = vperm.slane %v782, 0
    %v785 = vperm.slane %v782, 1
    %v786 = vperm.slane %v782, 2
    %v787 = vperm.slane %v782, 3
    %v788 = vperm.slane %v782, 4
    %v789 = vperm.slane %v782, 5
    %v790 = vperm.slane %v782, 6
    %v791 = vperm.slane %v782, 7
    %v864 = vunpack.c.l.b16 %v718
    %v865 = vunpack.c.h.b16 %v718
    %v866 = vunpack.c.l.b16 %v719
    %v867 = vunpack.c.h.b16 %v719
    %v868 = vunpack.c.l.b16 %v720
    %v869 = vunpack.c.h.b16 %v720
    %v870 = vunpack.c.l.b16 %v721
    %v871 = vunpack.c.h.b16 %v721
    %v872 = vunpack.c.l.b16 %v722
    %v873 = vunpack.c.h.b16 %v722
    %v874 = vunpack.c.l.b16 %v723
    %v875 = vunpack.c.h.b16 %v723
    %v876 = vunpack.c.l.b16 %v724
    %v877 = vunpack.c.h.b16 %v724
    %v878 = vunpack.c.l.b16 %v725
    %v879 = vunpack.c.h.b16 %v725
    %v880 = vunpack.c.l.b16 %v726
    %v881 = vunpack.c.h.b16 %v726
    %v882 = vunpack.c.l.b16 %v727
    %v883 = vunpack.c.h.b16 %v727
    %v884 = vunpack.c.l.b16 %v728
    %v885 = vunpack.c.h.b16 %v728
    %v886 = vunpack.c.l.b16 %v729
    %v887 = vunpack.c.h.b16 %v729
    %v888 = vunpack.c.l.b16 %v730
    %v889 = vunpack.c.h.b16 %v730
    %v890 = vunpack.c.l.b16 %v731
    %v891 = vunpack.c.h.b16 %v731
    %v892 = vunpack.c.l.b16 %v732
    %v893 = vunpack.c.h.b16 %v732
    %v894 = vunpack.c.l.b16 %v733
    %v895 = vunpack.c.h.b16 %v733
    %v896 = vunpack.c.l.b16 %v734
    %v897 = vunpack.c.h.b16 %v734
    %v898 = vunpack.c.l.b16 %v735
    %v899 = vunpack.c.h.b16 %v735
    %v900 = vunpack.c.l.b16 %v736
    %v901 = vunpack.c.h.b16 %v736
    %v902 = vunpack.c.l.b16 %v737
    %v903 = vunpack.c.h.b16 %v737
    %v904 = vunpack.c.l.b16 %v738
    %v905 = vunpack.c.h.b16 %v738
    %v906 = vunpack.c.l.b16 %v739
    %v907 = vunpack.c.h.b16 %v739
    %v908 = vunpack.c.l.b16 %v740
    %v909 = vunpack.c.h.b16 %v740
    %v910 = vunpack.c.l.b16 %v741
    %v911 = vunpack.c.h.b16 %v741
    %v912 = vunpack.c.l.b16 %v742
    %v913 = vunpack.c.h.b16 %v742
    %v914 = vunpack.c.l.b16 %v743
    %v915 = vunpack.c.h.b16 %v743
    %v916 = vunpack.c.l.b16 %v744
    %v917 = vunpack.c.h.b16 %v744
    %v918 = vunpack.c.l.b16 %v745
    %v919 = vunpack.c.h.b16 %v745
    %v920 = vunpack.c.l.b16 %v746
    %v921 = vunpack.c.h.b16 %v746
    %v922 = vunpack.c.l.b16 %v747
    %v923 = vunpack.c.h.b16 %v747
    %v924 = vunpack.c.l.b16 %v748
    %v925 = vunpack.c.h.b16 %v748
    %v926 = vunpack.c.l.b16 %v749
    %v927 = vunpack.c.h.b16 %v749
    %v928 = vunpack.c.l.b16 %v750
    %v929 = vunpack.c.h.b16 %v750
    %v930 = vunpack.c.l.b16 %v751
    %v931 = vunpack.c.h.b16 %v751
    %v932 = vunpack.c.l.b16 %v752
    %v933 = vunpack.c.h.b16 %v752
    %v934 = vunpack.c.l.b16 %v753
    %v935 = vunpack.c.h.b16 %v753
    %v936 = vunpack.c.l.b16 %v754
    %v937 = vunpack.c.h.b16 %v754
    %v938 = vunpack.c.l.b16 %v755
    %v939 = vunpack.c.h.b16 %v755
    %v940 = vunpack.c.l.b16 %v756
    %v941 = vunpack.c.h.b16 %v756
    %v942 = vunpack.c.l.b16 %v757
    %v943 = vunpack.c.h.b16 %v757
    %v944 = vunpack.c.l.b16 %v758
    %v945 = vunpack.c.h.b16 %v758
    %v946 = vunpack.c.l.b16 %v759
    %v947 = vunpack.c.h.b16 %v759
    %v948 = vunpack.c.l.b16 %v760
    %v949 = vunpack.c.h.b16 %v760
    %v950 = vunpack.c.l.b16 %v761
    %v951 = vunpack.c.h.b16 %v761
    %v952 = vunpack.c.l.b16 %v762
    %v953 = vunpack.c.h.b16 %v762
    %v954 = vunpack.c.l.b16 %v763
    %v955 = vunpack.c.h.b16 %v763
    %v956 = vunpack.c.l.b16 %v764
    %v957 = vunpack.c.h.b16 %v764
    %v958 = vunpack.c.l.b16 %v765
    %v959 = vunpack.c.h.b16 %v765
    %v960 = vunpack.c.l.b16 %v766
    %v961 = vunpack.c.h.b16 %v766
    %v962 = vunpack.c.l.b16 %v767
    %v963 = vunpack.c.h.b16 %v767
    %v964 = vunpack.c.l.b16 %v768
    %v965 = vunpack.c.h.b16 %v768
    %v966 = vunpack.c.l.b16 %v769
    %v967 = vunpack.c.h.b16 %v769
    %v968 = vunpack.c.l.b16 %v770
    %v969 = vunpack.c.h.b16 %v770
    %v970 = vunpack.c.l.b16 %v771
    %v971 = vunpack.c.h.b16 %v771
    %v972 = vunpack.c.l.b16 %v772
    %v973 = vunpack.c.h.b16 %v772
    %v974 = vunpack.c.l.b16 %v773
    %v975 = vunpack.c.h.b16 %v773
    %v976 = vunpack.c.l.b16 %v774
    %v977 = vunpack.c.h.b16 %v774
    %v978 = vunpack.c.l.b16 %v775
    %v979 = vunpack.c.h.b16 %v775
    %v980 = vunpack.c.l.b16 %v776
    %v981 = vunpack.c.h.b16 %v776
    %v982 = vunpack.c.l.b16 %v777
    %v983 = vunpack.c.h.b16 %v777
    %v984 = vunpack.c.l.b16 %v778
    %v985 = vunpack.c.h.b16 %v778
    %v986 = vunpack.c.l.b16 %v779
    %v987 = vunpack.c.h.b16 %v779
    %v988 = vunpack.c.l.b16 %v780
    %v989 = vunpack.c.h.b16 %v780
    %v990 = vunpack.c.l.b16 %v781
    %v991 = vunpack.c.h.b16 %v781
    %v992 = vpack.c.b16 %v872, %v864
    %v993 = vpack.c.b16 %v873, %v865
    %v994 = vpack.c.b16 %v874, %v866
    %v995 = vpack.c.b16 %v875, %v867
    %v996 = vpack.c.b16 %v876, %v868
    %v997 = vpack.c.b16 %v877, %v869
    %v998 = vpack.c.b16 %v878, %v870
    %v999 = vpack.c.b16 %v879, %v871
    %v1000 = vpack.c.b16 %v888, %v880
    %v1001 = vpack.c.b16 %v889, %v881
    %v1002 = vpack.c.b16 %v890, %v882
    %v1003 = vpack.c.b16 %v891, %v883
    %v1004 = vpack.c.b16 %v892, %v884
    %v1005 = vpack.c.b16 %v893, %v885
    %v1006 = vpack.c.b16 %v894, %v886
    %v1007 = vpack.c.b16 %v895, %v887
    %v1008 = vpack.c.b16 %v904, %v896
    %v1009 = vpack.c.b16 %v905, %v897
    %v1010 = vpack.c.b16 %v906, %v898
    %v1011 = vpack.c.b16 %v907, %v899
    %v1012 = vpack.c.b16 %v908, %v900
    %v1013 = vpack.c.b16 %v909, %v901
    %v1014 = vpack.c.b16 %v910, %v902
    %v1015 = vpack.c.b16 %v911, %v903
    %v1016 = vpack.c.b16 %v920, %v912
    %v1017 = vpack.c.b16 %v921, %v913
    %v1018 = vpack.c.b16 %v922, %v914
    %v1019 = vpack.c.b16 %v923, %v915
    %v1020 = vpack.c.b16 %v924, %v916
    %v1021 = vpack.c.b16 %v925, %v917
    %v1022 = vpack.c.b16 %v926, %v918
    %v1023 = vpack.c.b16 %v927, %v919
    %v1024 = vpack.c.b16 %v936, %v928
    %v1025 = vpack.c.b16 %v937, %v929
    %v1026 = vpack.c.b16 %v938, %v930
    %v1027 = vpack.c.b16 %v939, %v931
    %v1028 = vpack.c.b16 %v940, %v932
    %v1029 = vpack.c.b16 %v941, %v933
    %v1030 = vpack.c.b16 %v942, %v934
    %v1031 = vpack.c.b16 %v943, %v935
    %v1032 = vpack.c.b16 %v952, %v944
    %v1033 = vpack.c.b16 %v953, %v945
    %v1034 = vpack.c.b16 %v954, %v946
    %v1035 = vpack.c.b16 %v955, %v947
    %v1036 = vpack.c.b16 %v956, %v948
    %v1037 = vpack.c.b16 %v957, %v949
    %v1038 = vpack.c.b16 %v958, %v950
    %v1039 = vpack.c.b16 %v959, %v951
    %v1040 = vpack.c.b16 %v968, %v960
    %v1041 = vpack.c.b16 %v969, %v961
    %v1042 = vpack.c.b16 %v970, %v962
    %v1043 = vpack.c.b16 %v971, %v963
    %v1044 = vpack.c.b16 %v972, %v964
    %v1045 = vpack.c.b16 %v973, %v965
    %v1046 = vpack.c.b16 %v974, %v966
    %v1047 = vpack.c.b16 %v975, %v967
    %v1048 = vpack.c.b16 %v984, %v976
    %v1049 = vpack.c.b16 %v985, %v977
    %v1050 = vpack.c.b16 %v986, %v978
    %v1051 = vpack.c.b16 %v987, %v979
    %v1052 = vpack.c.b16 %v988, %v980
    %v1053 = vpack.c.b16 %v989, %v981
    %v1054 = vpack.c.b16 %v990, %v982
    %v1055 = vpack.c.b16 %v991, %v983
    %1120 = vmatpush.bf16.msra.mxu0 %v1048
    %1121 = vmatpush.bf16.msra.mxu0 %v1040
    %1122 = vmatpush.bf16.msra.mxu0 %v1032
    %1123 = vmatpush.bf16.msra.mxu0 %v1024
    %1124 = vmatpush.bf16.msra.mxu0 %v1016
    %1125 = vmatpush.bf16.msra.mxu0 %v1008
    %1126 = vmatpush.bf16.msra.mxu0 %v1000
    %1127 = vmatpush.bf16.msra.mxu0 %v992
    %1128 = vmatmul.bf16.gmra.mxu0 %v717
    %v1129 = vpop.f32.mrf.mxu0
    %v1130 = vadd.f32 %v784, %v1129
    %v1131 = vpop.f32.mrf.mxu0
    %1132 = vdwg.mxu0
    %1133 = vmatpush.bf16.msra.mxu0 %v1049
    %1134 = vmatpush.bf16.msra.mxu0 %v1041
    %1135 = vmatpush.bf16.msra.mxu0 %v1033
    %1136 = vmatpush.bf16.msra.mxu0 %v1025
    %1137 = vmatpush.bf16.msra.mxu0 %v1017
    %1138 = vmatpush.bf16.msra.mxu0 %v1009
    %1139 = vmatpush.bf16.msra.mxu0 %v1001
    %1140 = vmatpush.bf16.msra.mxu0 %v993
    %1141 = vmatmul.bf16.gmra.mxu0 %v717
    %v1142 = vpop.f32.mrf.mxu0
    %v1143 = vadd.f32 %v785, %v1142
    %v1144 = vpop.f32.mrf.mxu0
    %1145 = vdwg.mxu0
    %1146 = vmatpush.bf16.msra.mxu0 %v1050
    %1147 = vmatpush.bf16.msra.mxu0 %v1042
    %1148 = vmatpush.bf16.msra.mxu0 %v1034
    %1149 = vmatpush.bf16.msra.mxu0 %v1026
    %1150 = vmatpush.bf16.msra.mxu0 %v1018
    %1151 = vmatpush.bf16.msra.mxu0 %v1010
    %1152 = vmatpush.bf16.msra.mxu0 %v1002
    %1153 = vmatpush.bf16.msra.mxu0 %v994
    %1154 = vmatmul.bf16.gmra.mxu0 %v717
    %v1155 = vpop.f32.mrf.mxu0
    %v1156 = vadd.f32 %v786, %v1155
    %v1157 = vpop.f32.mrf.mxu0
    %1158 = vdwg.mxu0
    %1159 = vmatpush.bf16.msra.mxu0 %v1051
    %1160 = vmatpush.bf16.msra.mxu0 %v1043
    %1161 = vmatpush.bf16.msra.mxu0 %v1035
    %1162 = vmatpush.bf16.msra.mxu0 %v1027
    %1163 = vmatpush.bf16.msra.mxu0 %v1019
    %1164 = vmatpush.bf16.msra.mxu0 %v1011
    %1165 = vmatpush.bf16.msra.mxu0 %v1003
    %1166 = vmatpush.bf16.msra.mxu0 %v995
    %1167 = vmatmul.bf16.gmra.mxu0 %v717
    %v1168 = vpop.f32.mrf.mxu0
    %v1169 = vadd.f32 %v787, %v1168
    %v1170 = vpop.f32.mrf.mxu0
    %1171 = vdwg.mxu0
    %1172 = vmatpush.bf16.msra.mxu0 %v1052
    %1173 = vmatpush.bf16.msra.mxu0 %v1044
    %1174 = vmatpush.bf16.msra.mxu0 %v1036
    %1175 = vmatpush.bf16.msra.mxu0 %v1028
    %1176 = vmatpush.bf16.msra.mxu0 %v1020
    %1177 = vmatpush.bf16.msra.mxu0 %v1012
    %1178 = vmatpush.bf16.msra.mxu0 %v1004
    %1179 = vmatpush.bf16.msra.mxu0 %v996
    %1180 = vmatmul.bf16.gmra.mxu0 %v717
    %v1181 = vpop.f32.mrf.mxu0
    %v1182 = vadd.f32 %v788, %v1181
    %v1183 = vpop.f32.mrf.mxu0
    %1184 = vdwg.mxu0
    %1185 = vmatpush.bf16.msra.mxu0 %v1053
    %1186 = vmatpush.bf16.msra.mxu0 %v1045
    %1187 = vmatpush.bf16.msra.mxu0 %v1037
    %1188 = vmatpush.bf16.msra.mxu0 %v1029
    %1189 = vmatpush.bf16.msra.mxu0 %v1021
    %1190 = vmatpush.bf16.msra.mxu0 %v1013
    %1191 = vmatpush.bf16.msra.mxu0 %v1005
    %1192 = vmatpush.bf16.msra.mxu0 %v997
    %1193 = vmatmul.bf16.gmra.mxu0 %v717
    %v1194 = vpop.f32.mrf.mxu0
    %v1195 = vadd.f32 %v789, %v1194
    %v1196 = vpop.f32.mrf.mxu0
    %1197 = vdwg.mxu0
    %1198 = vmatpush.bf16.msra.mxu0 %v1054
    %1199 = vmatpush.bf16.msra.mxu0 %v1046
    %1200 = vmatpush.bf16.msra.mxu0 %v1038
    %1201 = vmatpush.bf16.msra.mxu0 %v1030
    %1202 = vmatpush.bf16.msra.mxu0 %v1022
    %1203 = vmatpush.bf16.msra.mxu0 %v1014
    %1204 = vmatpush.bf16.msra.mxu0 %v1006
    %1205 = vmatpush.bf16.msra.mxu0 %v998
    %1206 = vmatmul.bf16.gmra.mxu0 %v717
    %v1207 = vpop.f32.mrf.mxu0
    %v1208 = vadd.f32 %v790, %v1207
    %v1209 = vpop.f32.mrf.mxu0
    %1210 = vdwg.mxu0
    %1211 = vmatpush.bf16.msra.mxu0 %v1055
    %1212 = vmatpush.bf16.msra.mxu0 %v1047
    %1213 = vmatpush.bf16.msra.mxu0 %v1039
    %1214 = vmatpush.bf16.msra.mxu0 %v1031
    %1215 = vmatpush.bf16.msra.mxu0 %v1023
    %1216 = vmatpush.bf16.msra.mxu0 %v1015
    %1217 = vmatpush.bf16.msra.mxu0 %v1007
    %1218 = vmatpush.bf16.msra.mxu0 %v999
    %1219 = vmatmul.bf16.gmra.mxu0 %v717
    %v1220 = vpop.f32.mrf.mxu0
    %v1221 = vadd.f32 %v791, %v1220
    %v1222 = vpop.f32.mrf.mxu0
    %1223 = vdwg.mxu0
    %v1224 = vsub.f32 0.0, %v1130
    %v1225 = vsub.f32 0.0, %v1143
    %v1226 = vsub.f32 0.0, %v1156
    %v1227 = vsub.f32 0.0, %v1169
    %v1228 = vsub.f32 0.0, %v1182
    %v1229 = vsub.f32 0.0, %v1195
    %v1230 = vsub.f32 0.0, %v1208
    %v1231 = vsub.f32 0.0, %v1221
    %v1232 = vmul.f32 %v1224, 1.442695
    %v1233 = vpow.pop %v1232
    %v1234 = vmul.f32 %v1225, 1.442695
    %v1235 = vpow.pop %v1234
    %v1236 = vmul.f32 %v1226, 1.442695
    %v1237 = vpow.pop %v1236
    %v1238 = vmul.f32 %v1227, 1.442695
    %v1239 = vpow.pop %v1238
    %v1240 = vmul.f32 %v1228, 1.442695
    %v1241 = vpow.pop %v1240
    %v1242 = vmul.f32 %v1229, 1.442695
    %v1243 = vpow.pop %v1242
    %v1244 = vmul.f32 %v1230, 1.442695
    %v1245 = vpow.pop %v1244
    %v1246 = vmul.f32 %v1231, 1.442695
    %v1247 = vpow.pop %v1246
    %v1248 = vadd.f32 %v1233, 1.0
    %v1249 = vadd.f32 %v1235, 1.0
    %v1250 = vadd.f32 %v1237, 1.0
    %v1251 = vadd.f32 %v1239, 1.0
    %v1252 = vadd.f32 %v1241, 1.0
    %v1253 = vadd.f32 %v1243, 1.0
    %v1254 = vadd.f32 %v1245, 1.0
    %v1255 = vadd.f32 %v1247, 1.0
    %v1256 = vrcp.pop %v1248
    %v1257 = vrcp.pop %v1249
    %v1258 = vrcp.pop %v1250
    %v1259 = vrcp.pop %v1251
    %v1260 = vrcp.pop %v1252
    %v1261 = vrcp.pop %v1253
    %v1262 = vrcp.pop %v1254
    %v1263 = vrcp.pop %v1255
    %v1264 = vpack.c.bf16 %v1257, %v1256
    %v1265 = vpack.c.bf16 %v1259, %v1258
    %v1266 = vpack.c.bf16 %v1261, %v1260
    %v1267 = vpack.c.bf16 %v1263, %v1262
    %1268 = vst [vmem:[#allocation10] sm:$0xff] %v1264
    %1269 = vst [vmem:[#allocation10 + $0x8] sm:$0xff] %v1265
    %1270 = vst [vmem:[#allocation10 + $0x10] sm:$0xff] %v1266
    %1271 = vst [vmem:[#allocation10 + $0x18] sm:$0xff] %v1267
    // Predicated region
    $region38: #{tpu_custom_call.1} parent=1 // pred_check
      _
    $region39: #{tpu_custom_call.1} parent=1 // pred_check_branch
      %1273 = sbr.rel (0) target = $region41
    $region40: #{tpu_custom_call.1} parent=1 // pred_region
      %1275 = vsyncadd [#allocation4], 0
      %s1277 = sshll.u32 [#allocation10], 4
      %s1278 = int_to_ptr.vmem [resolvable:$true] %s1277
      %s1279 = sshll.u32 %s5, 4
      %s1280 = int_to_ptr.hbm [resolvable:$true] %s1279
      %1282 = dma.vmem_to_hbm [thread:$0]  %s1278, 512, %s1280, [#allocation4]
    $region41: #{tpu_custom_call.1} parent=1 // pred_fallthru
      _
    // Predicated region
    $region42: #{tpu_custom_call.1} parent=1 // pred_check
      _
    $region43: #{tpu_custom_call.1} parent=1 // pred_check_branch
      %1284 = sbr.rel (0) target = $region45
    $region44: #{tpu_custom_call.1} parent=1 // pred_region
      %1286 = dma.done [#allocation4], 512
    $region45: #{tpu_custom_call.1} parent=1 // pred_fallthru
      _
    %1287 = vsyncpa [#allocation3], 1
    %1288 = vsyncpa [#allocation6], 1
    %1289 = vsyncpa [#allocation9], 1
    %1290 = vsyncpa [#allocation4], 1

// kernel: tpu_custom_call.1
$region0: #{tpu_custom_call.1}
  #allocation0 [shape = 'u32[]', space=smem, size = 0x4, offset = 0x4, fixed_abs, tag = 'smem constant byte address 0x4 - core index']
  #allocation1 [shape = 'u32[72,128]{1,0:T(1,128)}', space=vmem, size = 0x9000, scoped, tag = 'internal scratch']
  %s0 = inlined_call_operand.hbm [shape: f32[8,1024], index: 0, kind: input, shape index: {}]
  %s1 = inlined_call_operand.hbm [shape: bf16[1024,128], index: 1, kind: input, shape index: {}]
  %s2 = inlined_call_operand.vmem [shape: f32[1,128], index: 2, kind: input, shape index: {}]
  %s3 = inlined_call_operand.hbm [shape: bf16[128,1024], index: 3, kind: input, shape index: {}]
  %s4 = inlined_call_operand.hbm [shape: f32[1,1024], index: 4, kind: input, shape index: {}]
  %s5 = inlined_call_operand.hbm [shape: bf16[8,1024], index: 5, kind: output, shape index: {}]
  %s6 = sld [smem:[#allocation0]]
  $region46: #{tpu_custom_call.1} parent=0
    _
  %s8 = ssub.s32 1, %s6
  %s9 = scalar_select 0, %s8, %s6
  $region1: #{tpu_custom_call.1} parent=0
    #allocation2 [shape = 'u8[32768]{0}', space=vmem, size = 0x8000, scoped, tag = 'input window, operand 0, single buffered']
    #allocation3 [shape = 's32[1]{0}', space=sflag, size = 0x4, scoped, tag = 'scoped memory for tpu_custom_call.1']
    #allocation4 [shape = 's32[1]{0}', space=sflag, size = 0x4, scoped, tag = 'scoped memory for tpu_custom_call.1']
    #allocation5 [shape = 'u8[262144]{0}', space=vmem, size = 0x40000, scoped, tag = 'input window, operand 1, single buffered']
    #allocation6 [shape = 's32[1]{0}', space=sflag, size = 0x4, scoped, tag = 'scoped memory for tpu_custom_call.1']
    #allocation7 [shape = 'u8[262144]{0}', space=vmem, size = 0x40000, scoped, tag = 'input window, operand 3, single buffered']
    #allocation8 [shape = 'u8[4096]{0}', space=vmem, size = 0x1000, scoped, tag = 'input window, operand 4, single buffered']
    #allocation9 [shape = 's32[1]{0}', space=sflag, size = 0x4, scoped, tag = 'scoped memory for tpu_custom_call.1']
    #allocation10 [shape = 'u8[16384]{0}', space=vmem, size = 0x4000, scoped, tag = 'output window, operand 0, single buffered']
    %10 = vsyncpa [#allocation3], 0
    %11 = vsyncpa [#allocation6], 0
    %12 = vsyncpa [#allocation9], 0
    %13 = vsyncpa [#allocation4], 0
    // Predicated region
    $region2: #{tpu_custom_call.1} parent=1 // pred_check
      _
    $region3: #{tpu_custom_call.1} parent=1 // pred_check_branch
      %15 = sbr.rel (0) target = $region5
    $region4: #{tpu_custom_call.1} parent=1 // pred_region
      %17 = vsyncadd [#allocation3], 0
      %s19 = sshll.u32 %s0, 4
      %s20 = int_to_ptr.hbm [resolvable:$true] %s19
      %s21 = sshll.u32 [#allocation2], 4
      %s22 = int_to_ptr.vmem [resolvable:$true] %s21
      %24 = dma.hbm_to_vmem [thread:$0]  %s20, 1024, %s22, [#allocation3]
    $region5: #{tpu_custom_call.1} parent=1 // pred_fallthru
      _
    // Predicated region
    $region6: #{tpu_custom_call.1} parent=1 // pred_check
      _
    $region7: #{tpu_custom_call.1} parent=1 // pred_check_branch
      %26 = sbr.rel (0) target = $region9
    $region8: #{tpu_custom_call.1} parent=1 // pred_region
      %28 = vsyncadd [#allocation6], 0
      %s29 = sshll.u32 %s1, 4
      %s30 = int_to_ptr.hbm [resolvable:$true] %s29
      %s31 = sshll.u32 [#allocation5], 4
      %s32 = int_to_ptr.vmem [resolvable:$true] %s31
      %37 = dma.hbm_to_vmem [thread:$0]  %s30, 8192, %s32, [#allocation6], 64, 64, 4
    $region9: #{tpu_custom_call.1} parent=1 // pred_fallthru
      _
    // Predicated region
    $region10: #{tpu_custom_call.1} parent=1 // pred_check
      _
    $region11: #{tpu_custom_call.1} parent=1 // pred_check_branch
      %39 = sbr.rel (0) target = $region13
    $region12: #{tpu_custom_call.1} parent=1 // pred_region
      _
    $region13: #{tpu_custom_call.1} parent=1 // pred_fallthru
      _
    // Predicated region
    $region14: #{tpu_custom_call.1} parent=1 // pred_check
      _
    $region15: #{tpu_custom_call.1} parent=1 // pred_check_branch
      %41 = sbr.rel (0) target = $region17
    $region16: #{tpu_custom_call.1} parent=1 // pred_region
      %43 = vsyncadd [#allocation6], 0
      %s44 = sshll.u32 %s3, 4
      %s45 = int_to_ptr.hbm [resolvable:$true] %s44
      %s46 = sshll.u32 [#allocation7], 4
      %s47 = int_to_ptr.vmem [resolvable:$true] %s46
      %52 = dma.hbm_to_vmem [thread:$0]  %s45, 8192, %s47, [#allocation6], 512, 512, 32
    $region17: #{tpu_custom_call.1} parent=1 // pred_fallthru
      _
    // Predicated region
    $region18: #{tpu_custom_call.1} parent=1 // pred_check
      _
    $region19: #{tpu_custom_call.1} parent=1 // pred_check_branch
      %54 = sbr.rel (0) target = $region21
    $region20: #{tpu_custom_call.1} parent=1 // pred_region
      %56 = vsyncadd [#allocation9], 0
      %s58 = sshll.u32 %s4, 4
      %s59 = int_to_ptr.hbm [resolvable:$true] %s58
      %s60 = sshll.u32 [#allocation8], 4
      %s61 = int_to_ptr.vmem [resolvable:$true] %s60
      %63 = dma.hbm_to_vmem [thread:$0]  %s59, 128, %s61, [#allocation9]
    $region21: #{tpu_custom_call.1} parent=1 // pred_fallthru
      _
    // Predicated region
    $region22: #{tpu_custom_call.1} parent=1 // pred_check
      _
    $region23: #{tpu_custom_call.1} parent=1 // pred_check_branch
      %65 = sbr.rel (0) target = $region25
    $region24: #{tpu_custom_call.1} parent=1 // pred_region
      %67 = dma.done [#allocation3], 1024
    $region25: #{tpu_custom_call.1} parent=1 // pred_fallthru
      _
    // Predicated region
    $region26: #{tpu_custom_call.1} parent=1 // pred_check
      _
    $region27: #{tpu_custom_call.1} parent=1 // pred_check_branch
      %69 = sbr.rel (0) target = $region29
    $region28: #{tpu_custom_call.1} parent=1 // pred_region
      %71 = dma.done [#allocation6], 8192
    $region29: #{tpu_custom_call.1} parent=1 // pred_fallthru
      _
    // Predicated region
    $region30: #{tpu_custom_call.1} parent=1 // pred_check
      _
    $region31: #{tpu_custom_call.1} parent=1 // pred_check_branch
      %73 = sbr.rel (0) target = $region33
    $region32: #{tpu_custom_call.1} parent=1 // pred_region
      %75 = dma.done [#allocation6], 8192
    $region33: #{tpu_custom_call.1} parent=1 // pred_fallthru
      _
    // Predicated region
    $region34: #{tpu_custom_call.1} parent=1 // pred_check
      _
    $region35: #{tpu_custom_call.1} parent=1 // pred_check_branch
      %77 = sbr.rel (0) target = $region37
    $region36: #{tpu_custom_call.1} parent=1 // pred_region
      %79 = dma.done [#allocation9], 128
    $region37: #{tpu_custom_call.1} parent=1 // pred_fallthru
      _
    %v80 = vld [vmem:[#allocation2] sm:$0xff]
    %v81 = vld [vmem:[#allocation2 + $0x8] sm:$0xff]
    %v82 = vld [vmem:[#allocation2 + $0x10] sm:$0xff]
    %v83 = vld [vmem:[#allocation2 + $0x18] sm:$0xff]
    %v84 = vld [vmem:[#allocation2 + $0x20] sm:$0xff]
    %v85 = vld [vmem:[#allocation2 + $0x28] sm:$0xff]
    %v86 = vld [vmem:[#allocation2 + $0x30] sm:$0xff]
    %v87 = vld [vmem:[#allocation2 + $0x38] sm:$0xff]
    %v88 = vpack.c.bf16 %v80, %v80
    %v89 = vpack.c.bf16 %v81, %v81
    %v90 = vpack.c.bf16 %v82, %v82
    %v91 = vpack.c.bf16 %v83, %v83
    %v92 = vpack.c.bf16 %v84, %v84
    %v93 = vpack.c.bf16 %v85, %v85
    %v94 = vpack.c.bf16 %v86, %v86
    %v95 = vpack.c.bf16 %v87, %v87
    %v96 = vld [vmem:[#allocation5] sm:$0xf]
    %v97 = vld [vmem:[#allocation5 + $0x4] sm:$0xf]
    %v98 = vld [vmem:[#allocation5 + $0x8] sm:$0xf]
    %v99 = vld [vmem:[#allocation5 + $0xc] sm:$0xf]
    %v100 = vld [vmem:[#allocation5 + $0x10] sm:$0xf]
    %v101 = vld [vmem:[#allocation5 + $0x14] sm:$0xf]
    %v102 = vld [vmem:[#allocation5 + $0x18] sm:$0xf]
    %v103 = vld [vmem:[#allocation5 + $0x1c] sm:$0xf]
    %v104 = vld [vmem:[#allocation5 + $0x20] sm:$0xf]
    %v105 = vld [vmem:[#allocation5 + $0x24] sm:$0xf]
    %v106 = vld [vmem:[#allocation5 + $0x28] sm:$0xf]
    %v107 = vld [vmem:[#allocation5 + $0x2c] sm:$0xf]
    %v108 = vld [vmem:[#allocation5 + $0x30] sm:$0xf]
    %v109 = vld [vmem:[#allocation5 + $0x34] sm:$0xf]
    %v110 = vld [vmem:[#allocation5 + $0x38] sm:$0xf]
    %v111 = vld [vmem:[#allocation5 + $0x3c] sm:$0xf]
    %v112 = vld [vmem:[#allocation5 + $0x40] sm:$0xf]
    %v113 = vld [vmem:[#allocation5 + $0x44] sm:$0xf]
    %v114 = vld [vmem:[#allocation5 + $0x48] sm:$0xf]
    %v115 = vld [vmem:[#allocation5 + $0x4c] sm:$0xf]
    %v116 = vld [vmem:[#allocation5 + $0x50] sm:$0xf]
    %v117 = vld [vmem:[#allocation5 + $0x54] sm:$0xf]
    %v118 = vld [vmem:[#allocation5 + $0x58] sm:$0xf]
    %v119 = vld [vmem:[#allocation5 + $0x5c] sm:$0xf]
    %v120 = vld [vmem:[#allocation5 + $0x60] sm:$0xf]
    %v121 = vld [vmem:[#allocation5 + $0x64] sm:$0xf]
    %v122 = vld [vmem:[#allocation5 + $0x68] sm:$0xf]
    %v123 = vld [vmem:[#allocation5 + $0x6c] sm:$0xf]
    %v124 = vld [vmem:[#allocation5 + $0x70] sm:$0xf]
    %v125 = vld [vmem:[#allocation5 + $0x74] sm:$0xf]
    %v126 = vld [vmem:[#allocation5 + $0x78] sm:$0xf]
    %v127 = vld [vmem:[#allocation5 + $0x7c] sm:$0xf]
    %v128 = vld [vmem:[#allocation5 + $0x80] sm:$0xf]
    %v129 = vld [vmem:[#allocation5 + $0x84] sm:$0xf]
    %v130 = vld [vmem:[#allocation5 + $0x88] sm:$0xf]
    %v131 = vld [vmem:[#allocation5 + $0x8c] sm:$0xf]
    %v132 = vld [vmem:[#allocation5 + $0x90] sm:$0xf]
    %v133 = vld [vmem:[#allocation5 + $0x94] sm:$0xf]
    %v134 = vld [vmem:[#allocation5 + $0x98] sm:$0xf]
    %v135 = vld [vmem:[#allocation5 + $0x9c] sm:$0xf]
    %v136 = vld [vmem:[#allocation5 + $0xa0] sm:$0xf]
    %v137 = vld [vmem:[#allocation5 + $0xa4] sm:$0xf]
    %v138 = vld [vmem:[#allocation5 + $0xa8] sm:$0xf]
    %v139 = vld [vmem:[#allocation5 + $0xac] sm:$0xf]
    %v140 = vld [vmem:[#allocation5 + $0xb0] sm:$0xf]
    %v141 = vld [vmem:[#allocation5 + $0xb4] sm:$0xf]
    %v142 = vld [vmem:[#allocation5 + $0xb8] sm:$0xf]
    %v143 = vld [vmem:[#allocation5 + $0xbc] sm:$0xf]
    %v144 = vld [vmem:[#allocation5 + $0xc0] sm:$0xf]
    %v145 = vld [vmem:[#allocation5 + $0xc4] sm:$0xf]
    %v146 = vld [vmem:[#allocation5 + $0xc8] sm:$0xf]
    %v147 = vld [vmem:[#allocation5 + $0xcc] sm:$0xf]
    %v148 = vld [vmem:[#allocation5 + $0xd0] sm:$0xf]
    %v149 = vld [vmem:[#allocation5 + $0xd4] sm:$0xf]
    %v150 = vld [vmem:[#allocation5 + $0xd8] sm:$0xf]
    %v151 = vld [vmem:[#allocation5 + $0xdc] sm:$0xf]
    %v152 = vld [vmem:[#allocation5 + $0xe0] sm:$0xf]
    %v153 = vld [vmem:[#allocation5 + $0xe4] sm:$0xf]
    %v154 = vld [vmem:[#allocation5 + $0xe8] sm:$0xf]
    %v155 = vld [vmem:[#allocation5 + $0xec] sm:$0xf]
    %v156 = vld [vmem:[#allocation5 + $0xf0] sm:$0xf]
    %v157 = vld [vmem:[#allocation5 + $0xf4] sm:$0xf]
    %v158 = vld [vmem:[#allocation5 + $0xf8] sm:$0xf]
    %v159 = vld [vmem:[#allocation5 + $0xfc] sm:$0xf]
    %v160 = vld [vmem:[#allocation5 + $0x100] sm:$0xf]
    %v161 = vld [vmem:[#allocation5 + $0x104] sm:$0xf]
    %v162 = vld [vmem:[#allocation5 + $0x108] sm:$0xf]
    %v163 = vld [vmem:[#allocation5 + $0x10c] sm:$0xf]
    %v164 = vld [vmem:[#allocation5 + $0x110] sm:$0xf]
    %v165 = vld [vmem:[#allocation5 + $0x114] sm:$0xf]
    %v166 = vld [vmem:[#allocation5 + $0x118] sm:$0xf]
    %v167 = vld [vmem:[#allocation5 + $0x11c] sm:$0xf]
    %v168 = vld [vmem:[#allocation5 + $0x120] sm:$0xf]
    %v169 = vld [vmem:[#allocation5 + $0x124] sm:$0xf]
    %v170 = vld [vmem:[#allocation5 + $0x128] sm:$0xf]
    %v171 = vld [vmem:[#allocation5 + $0x12c] sm:$0xf]
    %v172 = vld [vmem:[#allocation5 + $0x130] sm:$0xf]
    %v173 = vld [vmem:[#allocation5 + $0x134] sm:$0xf]
    %v174 = vld [vmem:[#allocation5 + $0x138] sm:$0xf]
    %v175 = vld [vmem:[#allocation5 + $0x13c] sm:$0xf]
    %v176 = vld [vmem:[#allocation5 + $0x140] sm:$0xf]
    %v177 = vld [vmem:[#allocation5 + $0x144] sm:$0xf]
    %v178 = vld [vmem:[#allocation5 + $0x148] sm:$0xf]
    %v179 = vld [vmem:[#allocation5 + $0x14c] sm:$0xf]
    %v180 = vld [vmem:[#allocation5 + $0x150] sm:$0xf]
    %v181 = vld [vmem:[#allocation5 + $0x154] sm:$0xf]
    %v182 = vld [vmem:[#allocation5 + $0x158] sm:$0xf]
    %v183 = vld [vmem:[#allocation5 + $0x15c] sm:$0xf]
    %v184 = vld [vmem:[#allocation5 + $0x160] sm:$0xf]
    %v185 = vld [vmem:[#allocation5 + $0x164] sm:$0xf]
    %v186 = vld [vmem:[#allocation5 + $0x168] sm:$0xf]
    %v187 = vld [vmem:[#allocation5 + $0x16c] sm:$0xf]
    %v188 = vld [vmem:[#allocation5 + $0x170] sm:$0xf]
    %v189 = vld [vmem:[#allocation5 + $0x174] sm:$0xf]
    %v190 = vld [vmem:[#allocation5 + $0x178] sm:$0xf]
    %v191 = vld [vmem:[#allocation5 + $0x17c] sm:$0xf]
    %v192 = vld [vmem:[#allocation5 + $0x180] sm:$0xf]
    %v193 = vld [vmem:[#allocation5 + $0x184] sm:$0xf]
    %v194 = vld [vmem:[#allocation5 + $0x188] sm:$0xf]
    %v195 = vld [vmem:[#allocation5 + $0x18c] sm:$0xf]
    %v196 = vld [vmem:[#allocation5 + $0x190] sm:$0xf]
    %v197 = vld [vmem:[#allocation5 + $0x194] sm:$0xf]
    %v198 = vld [vmem:[#allocation5 + $0x198] sm:$0xf]
    %v199 = vld [vmem:[#allocation5 + $0x19c] sm:$0xf]
    %v200 = vld [vmem:[#allocation5 + $0x1a0] sm:$0xf]
    %v201 = vld [vmem:[#allocation5 + $0x1a4] sm:$0xf]
    %v202 = vld [vmem:[#allocation5 + $0x1a8] sm:$0xf]
    %v203 = vld [vmem:[#allocation5 + $0x1ac] sm:$0xf]
    %v204 = vld [vmem:[#allocation5 + $0x1b0] sm:$0xf]
    %v205 = vld [vmem:[#allocation5 + $0x1b4] sm:$0xf]
    %v206 = vld [vmem:[#allocation5 + $0x1b8] sm:$0xf]
    %v207 = vld [vmem:[#allocation5 + $0x1bc] sm:$0xf]
    %v208 = vld [vmem:[#allocation5 + $0x1c0] sm:$0xf]
    %v209 = vld [vmem:[#allocation5 + $0x1c4] sm:$0xf]
    %v210 = vld [vmem:[#allocation5 + $0x1c8] sm:$0xf]
    %v211 = vld [vmem:[#allocation5 + $0x1cc] sm:$0xf]
    %v212 = vld [vmem:[#allocation5 + $0x1d0] sm:$0xf]
    %v213 = vld [vmem:[#allocation5 + $0x1d4] sm:$0xf]
    %v214 = vld [vmem:[#allocation5 + $0x1d8] sm:$0xf]
    %v215 = vld [vmem:[#allocation5 + $0x1dc] sm:$0xf]
    %v216 = vld [vmem:[#allocation5 + $0x1e0] sm:$0xf]
    %v217 = vld [vmem:[#allocation5 + $0x1e4] sm:$0xf]
    %v218 = vld [vmem:[#allocation5 + $0x1e8] sm:$0xf]
    %v219 = vld [vmem:[#allocation5 + $0x1ec] sm:$0xf]
    %v220 = vld [vmem:[#allocation5 + $0x1f0] sm:$0xf]
    %v221 = vld [vmem:[#allocation5 + $0x1f4] sm:$0xf]
    %v222 = vld [vmem:[#allocation5 + $0x1f8] sm:$0xf]
    %v223 = vld [vmem:[#allocation5 + $0x1fc] sm:$0xf]
    %v224 = vld [vmem:[%s2] sm:$0x1]
    %v226 = vperm.slane %v224, 0
    %v356 = vunpack.c.l.b16 %v96
    %v357 = vunpack.c.l.b16 %v97
    %v358 = vunpack.c.l.b16 %v98
    %v359 = vunpack.c.l.b16 %v99
    %v360 = vunpack.c.l.b16 %v100
    %v361 = vunpack.c.l.b16 %v101
    %v362 = vunpack.c.l.b16 %v102
    %v363 = vunpack.c.l.b16 %v103
    %v364 = vunpack.c.l.b16 %v104
    %v365 = vunpack.c.l.b16 %v105
    %v366 = vunpack.c.l.b16 %v106
    %v367 = vunpack.c.l.b16 %v107
    %v368 = vunpack.c.l.b16 %v108
    %v369 = vunpack.c.l.b16 %v109
    %v370 = vunpack.c.l.b16 %v110
    %v371 = vunpack.c.l.b16 %v111
    %v372 = vunpack.c.l.b16 %v112
    %v373 = vunpack.c.l.b16 %v113
    %v374 = vunpack.c.l.b16 %v114
    %v375 = vunpack.c.l.b16 %v115
    %v376 = vunpack.c.l.b16 %v116
    %v377 = vunpack.c.l.b16 %v117
    %v378 = vunpack.c.l.b16 %v118
    %v379 = vunpack.c.l.b16 %v119
    %v380 = vunpack.c.l.b16 %v120
    %v381 = vunpack.c.l.b16 %v121
    %v382 = vunpack.c.l.b16 %v122
    %v383 = vunpack.c.l.b16 %v123
    %v384 = vunpack.c.l.b16 %v124
    %v385 = vunpack.c.l.b16 %v125
    %v386 = vunpack.c.l.b16 %v126
    %v387 = vunpack.c.l.b16 %v127
    %v388 = vunpack.c.l.b16 %v128
    %v389 = vunpack.c.l.b16 %v129
    %v390 = vunpack.c.l.b16 %v130
    %v391 = vunpack.c.l.b16 %v131
    %v392 = vunpack.c.l.b16 %v132
    %v393 = vunpack.c.l.b16 %v133
    %v394 = vunpack.c.l.b16 %v134
    %v395 = vunpack.c.l.b16 %v135
    %v396 = vunpack.c.l.b16 %v136
    %v397 = vunpack.c.l.b16 %v137
    %v398 = vunpack.c.l.b16 %v138
    %v399 = vunpack.c.l.b16 %v139
    %v400 = vunpack.c.l.b16 %v140
    %v401 = vunpack.c.l.b16 %v141
    %v402 = vunpack.c.l.b16 %v142
    %v403 = vunpack.c.l.b16 %v143
    %v404 = vunpack.c.l.b16 %v144
    %v405 = vunpack.c.l.b16 %v145
    %v406 = vunpack.c.l.b16 %v146
    %v407 = vunpack.c.l.b16 %v147
    %v408 = vunpack.c.l.b16 %v148
    %v409 = vunpack.c.l.b16 %v149
    %v410 = vunpack.c.l.b16 %v150
    %v411 = vunpack.c.l.b16 %v151
    %v412 = vunpack.c.l.b16 %v152
    %v413 = vunpack.c.l.b16 %v153
    %v414 = vunpack.c.l.b16 %v154
    %v415 = vunpack.c.l.b16 %v155
    %v416 = vunpack.c.l.b16 %v156
    %v417 = vunpack.c.l.b16 %v157
    %v418 = vunpack.c.l.b16 %v158
    %v419 = vunpack.c.l.b16 %v159
    %v420 = vunpack.c.l.b16 %v160
    %v421 = vunpack.c.l.b16 %v161
    %v422 = vunpack.c.l.b16 %v162
    %v423 = vunpack.c.l.b16 %v163
    %v424 = vunpack.c.l.b16 %v164
    %v425 = vunpack.c.l.b16 %v165
    %v426 = vunpack.c.l.b16 %v166
    %v427 = vunpack.c.l.b16 %v167
    %v428 = vunpack.c.l.b16 %v168
    %v429 = vunpack.c.l.b16 %v169
    %v430 = vunpack.c.l.b16 %v170
    %v431 = vunpack.c.l.b16 %v171
    %v432 = vunpack.c.l.b16 %v172
    %v433 = vunpack.c.l.b16 %v173
    %v434 = vunpack.c.l.b16 %v174
    %v435 = vunpack.c.l.b16 %v175
    %v436 = vunpack.c.l.b16 %v176
    %v437 = vunpack.c.l.b16 %v177
    %v438 = vunpack.c.l.b16 %v178
    %v439 = vunpack.c.l.b16 %v179
    %v440 = vunpack.c.l.b16 %v180
    %v441 = vunpack.c.l.b16 %v181
    %v442 = vunpack.c.l.b16 %v182
    %v443 = vunpack.c.l.b16 %v183
    %v444 = vunpack.c.l.b16 %v184
    %v445 = vunpack.c.l.b16 %v185
    %v446 = vunpack.c.l.b16 %v186
    %v447 = vunpack.c.l.b16 %v187
    %v448 = vunpack.c.l.b16 %v188
    %v449 = vunpack.c.l.b16 %v189
    %v450 = vunpack.c.l.b16 %v190
    %v451 = vunpack.c.l.b16 %v191
    %v452 = vunpack.c.l.b16 %v192
    %v453 = vunpack.c.l.b16 %v193
    %v454 = vunpack.c.l.b16 %v194
    %v455 = vunpack.c.l.b16 %v195
    %v456 = vunpack.c.l.b16 %v196
    %v457 = vunpack.c.l.b16 %v197
    %v458 = vunpack.c.l.b16 %v198
    %v459 = vunpack.c.l.b16 %v199
    %v460 = vunpack.c.l.b16 %v200
    %v461 = vunpack.c.l.b16 %v201
    %v462 = vunpack.c.l.b16 %v202
    %v463 = vunpack.c.l.b16 %v203
    %v464 = vunpack.c.l.b16 %v204
    %v465 = vunpack.c.l.b16 %v205
    %v466 = vunpack.c.l.b16 %v206
    %v467 = vunpack.c.l.b16 %v207
    %v468 = vunpack.c.l.b16 %v208
    %v469 = vunpack.c.l.b16 %v209
    %v470 = vunpack.c.l.b16 %v210
    %v471 = vunpack.c.l.b16 %v211
    %v472 = vunpack.c.l.b16 %v212
    %v473 = vunpack.c.l.b16 %v213
    %v474 = vunpack.c.l.b16 %v214
    %v475 = vunpack.c.l.b16 %v215
    %v476 = vunpack.c.l.b16 %v216
    %v477 = vunpack.c.l.b16 %v217
    %v478 = vunpack.c.l.b16 %v218
    %v479 = vunpack.c.l.b16 %v219
    %v480 = vunpack.c.l.b16 %v220
    %v481 = vunpack.c.l.b16 %v221
    %v482 = vunpack.c.l.b16 %v222
    %v483 = vunpack.c.l.b16 %v223
    %v484 = vpack.c.b16 %v357, %v356
    %v485 = vpack.c.b16 %v359, %v358
    %v486 = vpack.c.b16 %v361, %v360
    %v487 = vpack.c.b16 %v363, %v362
    %v488 = vpack.c.b16 %v365, %v364
    %v489 = vpack.c.b16 %v367, %v366
    %v490 = vpack.c.b16 %v369, %v368
    %v491 = vpack.c.b16 %v371, %v370
    %v492 = vpack.c.b16 %v373, %v372
    %v493 = vpack.c.b16 %v375, %v374
    %v494 = vpack.c.b16 %v377, %v376
    %v495 = vpack.c.b16 %v379, %v378
    %v496 = vpack.c.b16 %v381, %v380
    %v497 = vpack.c.b16 %v383, %v382
    %v498 = vpack.c.b16 %v385, %v384
    %v499 = vpack.c.b16 %v387, %v386
    %v500 = vpack.c.b16 %v389, %v388
    %v501 = vpack.c.b16 %v391, %v390
    %v502 = vpack.c.b16 %v393, %v392
    %v503 = vpack.c.b16 %v395, %v394
    %v504 = vpack.c.b16 %v397, %v396
    %v505 = vpack.c.b16 %v399, %v398
    %v506 = vpack.c.b16 %v401, %v400
    %v507 = vpack.c.b16 %v403, %v402
    %v508 = vpack.c.b16 %v405, %v404
    %v509 = vpack.c.b16 %v407, %v406
    %v510 = vpack.c.b16 %v409, %v408
    %v511 = vpack.c.b16 %v411, %v410
    %v512 = vpack.c.b16 %v413, %v412
    %v513 = vpack.c.b16 %v415, %v414
    %v514 = vpack.c.b16 %v417, %v416
    %v515 = vpack.c.b16 %v419, %v418
    %v516 = vpack.c.b16 %v421, %v420
    %v517 = vpack.c.b16 %v423, %v422
    %v518 = vpack.c.b16 %v425, %v424
    %v519 = vpack.c.b16 %v427, %v426
    %v520 = vpack.c.b16 %v429, %v428
    %v521 = vpack.c.b16 %v431, %v430
    %v522 = vpack.c.b16 %v433, %v432
    %v523 = vpack.c.b16 %v435, %v434
    %v524 = vpack.c.b16 %v437, %v436
    %v525 = vpack.c.b16 %v439, %v438
    %v526 = vpack.c.b16 %v441, %v440
    %v527 = vpack.c.b16 %v443, %v442
    %v528 = vpack.c.b16 %v445, %v444
    %v529 = vpack.c.b16 %v447, %v446
    %v530 = vpack.c.b16 %v449, %v448
    %v531 = vpack.c.b16 %v451, %v450
    %v532 = vpack.c.b16 %v453, %v452
    %v533 = vpack.c.b16 %v455, %v454
    %v534 = vpack.c.b16 %v457, %v456
    %v535 = vpack.c.b16 %v459, %v458
    %v536 = vpack.c.b16 %v461, %v460
    %v537 = vpack.c.b16 %v463, %v462
    %v538 = vpack.c.b16 %v465, %v464
    %v539 = vpack.c.b16 %v467, %v466
    %v540 = vpack.c.b16 %v469, %v468
    %v541 = vpack.c.b16 %v471, %v470
    %v542 = vpack.c.b16 %v473, %v472
    %v543 = vpack.c.b16 %v475, %v474
    %v544 = vpack.c.b16 %v477, %v476
    %v545 = vpack.c.b16 %v479, %v478
    %v546 = vpack.c.b16 %v481, %v480
    %v547 = vpack.c.b16 %v483, %v482
    %612 = vmatpush.bf16.msra.mxu0 %v491
    %613 = vmatpush.bf16.msra.mxu0 %v490
    %614 = vmatpush.bf16.msra.mxu0 %v489
    %615 = vmatpush.bf16.msra.mxu0 %v488
    %616 = vmatpush.bf16.msra.mxu0 %v487
    %617 = vmatpush.bf16.msra.mxu0 %v486
    %618 = vmatpush.bf16.msra.mxu0 %v485
    %619 = vmatpush.bf16.msra.mxu0 %v484
    %620 = vmatmul.bf16.gmra.mxu0 %v88
    %v621 = vpop.f32.mrf.mxu0
    %v622 = vadd.f32 %v226, %v621
    %v623 = vpop.f32.mrf.mxu0
    %624 = vdwg.mxu0
    %625 = vmatpush.bf16.msra.mxu0 %v499
    %626 = vmatpush.bf16.msra.mxu0 %v498
    %627 = vmatpush.bf16.msra.mxu0 %v497
    %628 = vmatpush.bf16.msra.mxu0 %v496
    %629 = vmatpush.bf16.msra.mxu0 %v495
    %630 = vmatpush.bf16.msra.mxu0 %v494
    %631 = vmatpush.bf16.msra.mxu0 %v493
    %632 = vmatpush.bf16.msra.mxu0 %v492
    %633 = vmatmul.bf16.gmra.mxu0 %v89
    %v634 = vpop.f32.mrf.mxu0
    %v635 = vadd.f32 %v622, %v634
    %v636 = vpop.f32.mrf.mxu0
    %637 = vdwg.mxu0
    %638 = vmatpush.bf16.msra.mxu0 %v507
    %639 = vmatpush.bf16.msra.mxu0 %v506
    %640 = vmatpush.bf16.msra.mxu0 %v505
    %641 = vmatpush.bf16.msra.mxu0 %v504
    %642 = vmatpush.bf16.msra.mxu0 %v503
    %643 = vmatpush.bf16.msra.mxu0 %v502
    %644 = vmatpush.bf16.msra.mxu0 %v501
    %645 = vmatpush.bf16.msra.mxu0 %v500
    %646 = vmatmul.bf16.gmra.mxu0 %v90
    %v647 = vpop.f32.mrf.mxu0
    %v648 = vadd.f32 %v635, %v647
    %v649 = vpop.f32.mrf.mxu0
    %650 = vdwg.mxu0
    %651 = vmatpush.bf16.msra.mxu0 %v515
    %652 = vmatpush.bf16.msra.mxu0 %v514
    %653 = vmatpush.bf16.msra.mxu0 %v513
    %654 = vmatpush.bf16.msra.mxu0 %v512
    %655 = vmatpush.bf16.msra.mxu0 %v511
    %656 = vmatpush.bf16.msra.mxu0 %v510
    %657 = vmatpush.bf16.msra.mxu0 %v509
    %658 = vmatpush.bf16.msra.mxu0 %v508
    %659 = vmatmul.bf16.gmra.mxu0 %v91
    %v660 = vpop.f32.mrf.mxu0
    %v661 = vadd.f32 %v648, %v660
    %v662 = vpop.f32.mrf.mxu0
    %663 = vdwg.mxu0
    %664 = vmatpush.bf16.msra.mxu0 %v523
    %665 = vmatpush.bf16.msra.mxu0 %v522
    %666 = vmatpush.bf16.msra.mxu0 %v521
    %667 = vmatpush.bf16.msra.mxu0 %v520
    %668 = vmatpush.bf16.msra.mxu0 %v519
    %669 = vmatpush.bf16.msra.mxu0 %v518
    %670 = vmatpush.bf16.msra.mxu0 %v517
    %671 = vmatpush.bf16.msra.mxu0 %v516
    %672 = vmatmul.bf16.gmra.mxu0 %v92
    %v673 = vpop.f32.mrf.mxu0
    %v674 = vadd.f32 %v661, %v673
    %v675 = vpop.f32.mrf.mxu0
    %676 = vdwg.mxu0
    %677 = vmatpush.bf16.msra.mxu0 %v531
    %678 = vmatpush.bf16.msra.mxu0 %v530
    %679 = vmatpush.bf16.msra.mxu0 %v529
    %680 = vmatpush.bf16.msra.mxu0 %v528
    %681 = vmatpush.bf16.msra.mxu0 %v527
    %682 = vmatpush.bf16.msra.mxu0 %v526
    %683 = vmatpush.bf16.msra.mxu0 %v525
    %684 = vmatpush.bf16.msra.mxu0 %v524
    %685 = vmatmul.bf16.gmra.mxu0 %v93
    %v686 = vpop.f32.mrf.mxu0
    %v687 = vadd.f32 %v674, %v686
    %v688 = vpop.f32.mrf.mxu0
    %689 = vdwg.mxu0
    %690 = vmatpush.bf16.msra.mxu0 %v539
    %691 = vmatpush.bf16.msra.mxu0 %v538
    %692 = vmatpush.bf16.msra.mxu0 %v537
    %693 = vmatpush.bf16.msra.mxu0 %v536
    %694 = vmatpush.bf16.msra.mxu0 %v535
    %695 = vmatpush.bf16.msra.mxu0 %v534
    %696 = vmatpush.bf16.msra.mxu0 %v533
    %697 = vmatpush.bf16.msra.mxu0 %v532
    %698 = vmatmul.bf16.gmra.mxu0 %v94
    %v699 = vpop.f32.mrf.mxu0
    %v700 = vadd.f32 %v687, %v699
    %v701 = vpop.f32.mrf.mxu0
    %702 = vdwg.mxu0
    %703 = vmatpush.bf16.msra.mxu0 %v547
    %704 = vmatpush.bf16.msra.mxu0 %v546
    %705 = vmatpush.bf16.msra.mxu0 %v545
    %706 = vmatpush.bf16.msra.mxu0 %v544
    %707 = vmatpush.bf16.msra.mxu0 %v543
    %708 = vmatpush.bf16.msra.mxu0 %v542
    %709 = vmatpush.bf16.msra.mxu0 %v541
    %710 = vmatpush.bf16.msra.mxu0 %v540
    %711 = vmatmul.bf16.gmra.mxu0 %v95
    %v712 = vpop.f32.mrf.mxu0
    %v713 = vadd.f32 %v700, %v712
    %v714 = vpop.f32.mrf.mxu0
    %715 = vdwg.mxu0
    %v716 = vmax.f32 %v713, 0.0
    %v717 = vpack.c.bf16 %v716, %v716
    %v718 = vld [vmem:[#allocation7] sm:$0xff]
    %v719 = vld [vmem:[#allocation7 + $0x8] sm:$0xff]
    %v720 = vld [vmem:[#allocation7 + $0x10] sm:$0xff]
    %v721 = vld [vmem:[#allocation7 + $0x18] sm:$0xff]
    %v722 = vld [vmem:[#allocation7 + $0x20] sm:$0xff]
    %v723 = vld [vmem:[#allocation7 + $0x28] sm:$0xff]
    %v724 = vld [vmem:[#allocation7 + $0x30] sm:$0xff]
    %v725 = vld [vmem:[#allocation7 + $0x38] sm:$0xff]
    %v726 = vld [vmem:[#allocation7 + $0x40] sm:$0xff]
    %v727 = vld [vmem:[#allocation7 + $0x48] sm:$0xff]
    %v728 = vld [vmem:[#allocation7 + $0x50] sm:$0xff]
    %v729 = vld [vmem:[#allocation7 + $0x58] sm:$0xff]
    %v730 = vld [vmem:[#allocation7 + $0x60] sm:$0xff]
    %v731 = vld [vmem:[#allocation7 + $0x68] sm:$0xff]
    %v732 = vld [vmem:[#allocation7 + $0x70] sm:$0xff]
    %v733 = vld [vmem:[#allocation7 + $0x78] sm:$0xff]
    %v734 = vld [vmem:[#allocation7 + $0x80] sm:$0xff]
    %v735 = vld [vmem:[#allocation7 + $0x88] sm:$0xff]
    %v736 = vld [vmem:[#allocation7 + $0x90] sm:$0xff]
    %v737 = vld [vmem:[#allocation7 + $0x98] sm:$0xff]
    %v738 = vld [vmem:[#allocation7 + $0xa0] sm:$0xff]
    %v739 = vld [vmem:[#allocation7 + $0xa8] sm:$0xff]
    %v740 = vld [vmem:[#allocation7 + $0xb0] sm:$0xff]
    %v741 = vld [vmem:[#allocation7 + $0xb8] sm:$0xff]
    %v742 = vld [vmem:[#allocation7 + $0xc0] sm:$0xff]
    %v743 = vld [vmem:[#allocation7 + $0xc8] sm:$0xff]
    %v744 = vld [vmem:[#allocation7 + $0xd0] sm:$0xff]
    %v745 = vld [vmem:[#allocation7 + $0xd8] sm:$0xff]
    %v746 = vld [vmem:[#allocation7 + $0xe0] sm:$0xff]
    %v747 = vld [vmem:[#allocation7 + $0xe8] sm:$0xff]
    %v748 = vld [vmem:[#allocation7 + $0xf0] sm:$0xff]
    %v749 = vld [vmem:[#allocation7 + $0xf8] sm:$0xff]
    %v750 = vld [vmem:[#allocation7 + $0x100] sm:$0xff]
    %v751 = vld [vmem:[#allocation7 + $0x108] sm:$0xff]
    %v752 = vld [vmem:[#allocation7 + $0x110] sm:$0xff]
    %v753 = vld [vmem:[#allocation7 + $0x118] sm:$0xff]
    %v754 = vld [vmem:[#allocation7 + $0x120] sm:$0xff]
    %v755 = vld [vmem:[#allocation7 + $0x128] sm:$0xff]
    %v756 = vld [vmem:[#allocation7 + $0x130] sm:$0xff]
    %v757 = vld [vmem:[#allocation7 + $0x138] sm:$0xff]
    %v758 = vld [vmem:[#allocation7 + $0x140] sm:$0xff]
    %v759 = vld [vmem:[#allocation7 + $0x148] sm:$0xff]
    %v760 = vld [vmem:[#allocation7 + $0x150] sm:$0xff]
    %v761 = vld [vmem:[#allocation7 + $0x158] sm:$0xff]
    %v762 = vld [vmem:[#allocation7 + $0x160] sm:$0xff]
    %v763 = vld [vmem:[#allocation7 + $0x168] sm:$0xff]
    %v764 = vld [vmem:[#allocation7 + $0x170] sm:$0xff]
    %v765 = vld [vmem:[#allocation7 + $0x178] sm:$0xff]
    %v766 = vld [vmem:[#allocation7 + $0x180] sm:$0xff]
    %v767 = vld [vmem:[#allocation7 + $0x188] sm:$0xff]
    %v768 = vld [vmem:[#allocation7 + $0x190] sm:$0xff]
    %v769 = vld [vmem:[#allocation7 + $0x198] sm:$0xff]
    %v770 = vld [vmem:[#allocation7 + $0x1a0] sm:$0xff]
    %v771 = vld [vmem:[#allocation7 + $0x1a8] sm:$0xff]
    %v772 = vld [vmem:[#allocation7 + $0x1b0] sm:$0xff]
    %v773 = vld [vmem:[#allocation7 + $0x1b8] sm:$0xff]
    %v774 = vld [vmem:[#allocation7 + $0x1c0] sm:$0xff]
    %v775 = vld [vmem:[#allocation7 + $0x1c8] sm:$0xff]
    %v776 = vld [vmem:[#allocation7 + $0x1d0] sm:$0xff]
    %v777 = vld [vmem:[#allocation7 + $0x1d8] sm:$0xff]
    %v778 = vld [vmem:[#allocation7 + $0x1e0] sm:$0xff]
    %v779 = vld [vmem:[#allocation7 + $0x1e8] sm:$0xff]
    %v780 = vld [vmem:[#allocation7 + $0x1f0] sm:$0xff]
    %v781 = vld [vmem:[#allocation7 + $0x1f8] sm:$0xff]
    %v782 = vld [vmem:[#allocation8] sm:$0xff]
    %v784 = vperm.slane %v782, 0
    %v785 = vperm.slane %v782, 1
    %v786 = vperm.slane %v782, 2
    %v787 = vperm.slane %v782, 3
    %v788 = vperm.slane %v782, 4
    %v789 = vperm.slane %v782, 5
    %v790 = vperm.slane %v782, 6
    %v791 = vperm.slane %v782, 7
    %v864 = vunpack.c.l.b16 %v718
    %v865 = vunpack.c.h.b16 %v718
    %v866 = vunpack.c.l.b16 %v719
    %v867 = vunpack.c.h.b16 %v719
    %v868 = vunpack.c.l.b16 %v720
    %v869 = vunpack.c.h.b16 %v720
    %v870 = vunpack.c.l.b16 %v721
    %v871 = vunpack.c.h.b16 %v721
    %v872 = vunpack.c.l.b16 %v722
    %v873 = vunpack.c.h.b16 %v722
    %v874 = vunpack.c.l.b16 %v723
    %v875 = vunpack.c.h.b16 %v723
    %v876 = vunpack.c.l.b16 %v724
    %v877 = vunpack.c.h.b16 %v724
    %v878 = vunpack.c.l.b16 %v725
    %v879 = vunpack.c.h.b16 %v725
    %v880 = vunpack.c.l.b16 %v726
    %v881 = vunpack.c.h.b16 %v726
    %v882 = vunpack.c.l.b16 %v727
    %v883 = vunpack.c.h.b16 %v727
    %v884 = vunpack.c.l.b16 %v728
    %v885 = vunpack.c.h.b16 %v728
    %v886 = vunpack.c.l.b16 %v729
    %v887 = vunpack.c.h.b16 %v729
    %v888 = vunpack.c.l.b16 %v730
    %v889 = vunpack.c.h.b16 %v730
    %v890 = vunpack.c.l.b16 %v731
    %v891 = vunpack.c.h.b16 %v731
    %v892 = vunpack.c.l.b16 %v732
    %v893 = vunpack.c.h.b16 %v732
    %v894 = vunpack.c.l.b16 %v733
    %v895 = vunpack.c.h.b16 %v733
    %v896 = vunpack.c.l.b16 %v734
    %v897 = vunpack.c.h.b16 %v734
    %v898 = vunpack.c.l.b16 %v735
    %v899 = vunpack.c.h.b16 %v735
    %v900 = vunpack.c.l.b16 %v736
    %v901 = vunpack.c.h.b16 %v736
    %v902 = vunpack.c.l.b16 %v737
    %v903 = vunpack.c.h.b16 %v737
    %v904 = vunpack.c.l.b16 %v738
    %v905 = vunpack.c.h.b16 %v738
    %v906 = vunpack.c.l.b16 %v739
    %v907 = vunpack.c.h.b16 %v739
    %v908 = vunpack.c.l.b16 %v740
    %v909 = vunpack.c.h.b16 %v740
    %v910 = vunpack.c.l.b16 %v741
    %v911 = vunpack.c.h.b16 %v741
    %v912 = vunpack.c.l.b16 %v742
    %v913 = vunpack.c.h.b16 %v742
    %v914 = vunpack.c.l.b16 %v743
    %v915 = vunpack.c.h.b16 %v743
    %v916 = vunpack.c.l.b16 %v744
    %v917 = vunpack.c.h.b16 %v744
    %v918 = vunpack.c.l.b16 %v745
    %v919 = vunpack.c.h.b16 %v745
    %v920 = vunpack.c.l.b16 %v746
    %v921 = vunpack.c.h.b16 %v746
    %v922 = vunpack.c.l.b16 %v747
    %v923 = vunpack.c.h.b16 %v747
    %v924 = vunpack.c.l.b16 %v748
    %v925 = vunpack.c.h.b16 %v748
    %v926 = vunpack.c.l.b16 %v749
    %v927 = vunpack.c.h.b16 %v749
    %v928 = vunpack.c.l.b16 %v750
    %v929 = vunpack.c.h.b16 %v750
    %v930 = vunpack.c.l.b16 %v751
    %v931 = vunpack.c.h.b16 %v751
    %v932 = vunpack.c.l.b16 %v752
    %v933 = vunpack.c.h.b16 %v752
    %v934 = vunpack.c.l.b16 %v753
    %v935 = vunpack.c.h.b16 %v753
    %v936 = vunpack.c.l.b16 %v754
    %v937 = vunpack.c.h.b16 %v754
    %v938 = vunpack.c.l.b16 %v755
    %v939 = vunpack.c.h.b16 %v755
    %v940 = vunpack.c.l.b16 %v756
    %v941 = vunpack.c.h.b16 %v756
    %v942 = vunpack.c.l.b16 %v757
    %v943 = vunpack.c.h.b16 %v757
    %v944 = vunpack.c.l.b16 %v758
    %v945 = vunpack.c.h.b16 %v758
    %v946 = vunpack.c.l.b16 %v759
    %v947 = vunpack.c.h.b16 %v759
    %v948 = vunpack.c.l.b16 %v760
    %v949 = vunpack.c.h.b16 %v760
    %v950 = vunpack.c.l.b16 %v761
    %v951 = vunpack.c.h.b16 %v761
    %v952 = vunpack.c.l.b16 %v762
    %v953 = vunpack.c.h.b16 %v762
    %v954 = vunpack.c.l.b16 %v763
    %v955 = vunpack.c.h.b16 %v763
    %v956 = vunpack.c.l.b16 %v764
    %v957 = vunpack.c.h.b16 %v764
    %v958 = vunpack.c.l.b16 %v765
    %v959 = vunpack.c.h.b16 %v765
    %v960 = vunpack.c.l.b16 %v766
    %v961 = vunpack.c.h.b16 %v766
    %v962 = vunpack.c.l.b16 %v767
    %v963 = vunpack.c.h.b16 %v767
    %v964 = vunpack.c.l.b16 %v768
    %v965 = vunpack.c.h.b16 %v768
    %v966 = vunpack.c.l.b16 %v769
    %v967 = vunpack.c.h.b16 %v769
    %v968 = vunpack.c.l.b16 %v770
    %v969 = vunpack.c.h.b16 %v770
    %v970 = vunpack.c.l.b16 %v771
    %v971 = vunpack.c.h.b16 %v771
    %v972 = vunpack.c.l.b16 %v772
    %v973 = vunpack.c.h.b16 %v772
    %v974 = vunpack.c.l.b16 %v773
    %v975 = vunpack.c.h.b16 %v773
    %v976 = vunpack.c.l.b16 %v774
    %v977 = vunpack.c.h.b16 %v774
    %v978 = vunpack.c.l.b16 %v775
    %v979 = vunpack.c.h.b16 %v775
    %v980 = vunpack.c.l.b16 %v776
    %v981 = vunpack.c.h.b16 %v776
    %v982 = vunpack.c.l.b16 %v777
    %v983 = vunpack.c.h.b16 %v777
    %v984 = vunpack.c.l.b16 %v778
    %v985 = vunpack.c.h.b16 %v778
    %v986 = vunpack.c.l.b16 %v779
    %v987 = vunpack.c.h.b16 %v779
    %v988 = vunpack.c.l.b16 %v780
    %v989 = vunpack.c.h.b16 %v780
    %v990 = vunpack.c.l.b16 %v781
    %v991 = vunpack.c.h.b16 %v781
    %v992 = vpack.c.b16 %v872, %v864
    %v993 = vpack.c.b16 %v873, %v865
    %v994 = vpack.c.b16 %v874, %v866
    %v995 = vpack.c.b16 %v875, %v867
    %v996 = vpack.c.b16 %v876, %v868
    %v997 = vpack.c.b16 %v877, %v869
    %v998 = vpack.c.b16 %v878, %v870
    %v999 = vpack.c.b16 %v879, %v871
    %v1000 = vpack.c.b16 %v888, %v880
    %v1001 = vpack.c.b16 %v889, %v881
    %v1002 = vpack.c.b16 %v890, %v882
    %v1003 = vpack.c.b16 %v891, %v883
    %v1004 = vpack.c.b16 %v892, %v884
    %v1005 = vpack.c.b16 %v893, %v885
    %v1006 = vpack.c.b16 %v894, %v886
    %v1007 = vpack.c.b16 %v895, %v887
    %v1008 = vpack.c.b16 %v904, %v896
    %v1009 = vpack.c.b16 %v905, %v897
    %v1010 = vpack.c.b16 %v906, %v898
    %v1011 = vpack.c.b16 %v907, %v899
    %v1012 = vpack.c.b16 %v908, %v900
    %v1013 = vpack.c.b16 %v909, %v901
    %v1014 = vpack.c.b16 %v910, %v902
    %v1015 = vpack.c.b16 %v911, %v903
    %v1016 = vpack.c.b16 %v920, %v912
    %v1017 = vpack.c.b16 %v921, %v913
    %v1018 = vpack.c.b16 %v922, %v914
    %v1019 = vpack.c.b16 %v923, %v915
    %v1020 = vpack.c.b16 %v924, %v916
    %v1021 = vpack.c.b16 %v925, %v917
    %v1022 = vpack.c.b16 %v926, %v918
    %v1023 = vpack.c.b16 %v927, %v919
    %v1024 = vpack.c.b16 %v936, %v928
    %v1025 = vpack.c.b16 %v937, %v929
    %v1026 = vpack.c.b16 %v938, %v930
    %v1027 = vpack.c.b16 %v939, %v931
    %v1028 = vpack.c.b16 %v940, %v932
    %v1029 = vpack.c.b16 %v941, %v933
    %v1030 = vpack.c.b16 %v942, %v934
    %v1031 = vpack.c.b16 %v943, %v935
    %v1032 = vpack.c.b16 %v952, %v944
    %v1033 = vpack.c.b16 %v953, %v945
    %v1034 = vpack.c.b16 %v954, %v946
    %v1035 = vpack.c.b16 %v955, %v947
    %v1036 = vpack.c.b16 %v956, %v948
    %v1037 = vpack.c.b16 %v957, %v949
    %v1038 = vpack.c.b16 %v958, %v950
    %v1039 = vpack.c.b16 %v959, %v951
    %v1040 = vpack.c.b16 %v968, %v960
    %v1041 = vpack.c.b16 %v969, %v961
    %v1042 = vpack.c.b16 %v970, %v962
    %v1043 = vpack.c.b16 %v971, %v963
    %v1044 = vpack.c.b16 %v972, %v964
    %v1045 = vpack.c.b16 %v973, %v965
    %v1046 = vpack.c.b16 %v974, %v966
    %v1047 = vpack.c.b16 %v975, %v967
    %v1048 = vpack.c.b16 %v984, %v976
    %v1049 = vpack.c.b16 %v985, %v977
    %v1050 = vpack.c.b16 %v986, %v978
    %v1051 = vpack.c.b16 %v987, %v979
    %v1052 = vpack.c.b16 %v988, %v980
    %v1053 = vpack.c.b16 %v989, %v981
    %v1054 = vpack.c.b16 %v990, %v982
    %v1055 = vpack.c.b16 %v991, %v983
    %1120 = vmatpush.bf16.msra.mxu0 %v1048
    %1121 = vmatpush.bf16.msra.mxu0 %v1040
    %1122 = vmatpush.bf16.msra.mxu0 %v1032
    %1123 = vmatpush.bf16.msra.mxu0 %v1024
    %1124 = vmatpush.bf16.msra.mxu0 %v1016
    %1125 = vmatpush.bf16.msra.mxu0 %v1008
    %1126 = vmatpush.bf16.msra.mxu0 %v1000
    %1127 = vmatpush.bf16.msra.mxu0 %v992
    %1128 = vmatmul.bf16.gmra.mxu0 %v717
    %v1129 = vpop.f32.mrf.mxu0
    %v1130 = vadd.f32 %v784, %v1129
    %v1131 = vpop.f32.mrf.mxu0
    %1132 = vdwg.mxu0
    %1133 = vmatpush.bf16.msra.mxu0 %v1049
    %1134 = vmatpush.bf16.msra.mxu0 %v1041
    %1135 = vmatpush.bf16.msra.mxu0 %v1033
    %1136 = vmatpush.bf16.msra.mxu0 %v1025
    %1137 = vmatpush.bf16.msra.mxu0 %v1017
    %1138 = vmatpush.bf16.msra.mxu0 %v1009
    %1139 = vmatpush.bf16.msra.mxu0 %v1001
    %1140 = vmatpush.bf16.msra.mxu0 %v993
    %1141 = vmatmul.bf16.gmra.mxu0 %v717
    %v1142 = vpop.f32.mrf.mxu0
    %v1143 = vadd.f32 %v785, %v1142
    %v1144 = vpop.f32.mrf.mxu0
    %1145 = vdwg.mxu0
    %1146 = vmatpush.bf16.msra.mxu0 %v1050
    %1147 = vmatpush.bf16.msra.mxu0 %v1042
    %1148 = vmatpush.bf16.msra.mxu0 %v1034
    %1149 = vmatpush.bf16.msra.mxu0 %v1026
    %1150 = vmatpush.bf16.msra.mxu0 %v1018
    %1151 = vmatpush.bf16.msra.mxu0 %v1010
    %1152 = vmatpush.bf16.msra.mxu0 %v1002
    %1153 = vmatpush.bf16.msra.mxu0 %v994
    %1154 = vmatmul.bf16.gmra.mxu0 %v717
    %v1155 = vpop.f32.mrf.mxu0
    %v1156 = vadd.f32 %v786, %v1155
    %v1157 = vpop.f32.mrf.mxu0
    %1158 = vdwg.mxu0
    %1159 = vmatpush.bf16.msra.mxu0 %v1051
    %1160 = vmatpush.bf16.msra.mxu0 %v1043
    %1161 = vmatpush.bf16.msra.mxu0 %v1035
    %1162 = vmatpush.bf16.msra.mxu0 %v1027
    %1163 = vmatpush.bf16.msra.mxu0 %v1019
    %1164 = vmatpush.bf16.msra.mxu0 %v1011
    %1165 = vmatpush.bf16.msra.mxu0 %v1003
    %1166 = vmatpush.bf16.msra.mxu0 %v995
    %1167 = vmatmul.bf16.gmra.mxu0 %v717
    %v1168 = vpop.f32.mrf.mxu0
    %v1169 = vadd.f32 %v787, %v1168
    %v1170 = vpop.f32.mrf.mxu0
    %1171 = vdwg.mxu0
    %1172 = vmatpush.bf16.msra.mxu0 %v1052
    %1173 = vmatpush.bf16.msra.mxu0 %v1044
    %1174 = vmatpush.bf16.msra.mxu0 %v1036
    %1175 = vmatpush.bf16.msra.mxu0 %v1028
    %1176 = vmatpush.bf16.msra.mxu0 %v1020
    %1177 = vmatpush.bf16.msra.mxu0 %v1012
    %1178 = vmatpush.bf16.msra.mxu0 %v1004
    %1179 = vmatpush.bf16.msra.mxu0 %v996
    %1180 = vmatmul.bf16.gmra.mxu0 %v717
    %v1181 = vpop.f32.mrf.mxu0
    %v1182 = vadd.f32 %v788, %v1181
    %v1183 = vpop.f32.mrf.mxu0
    %1184 = vdwg.mxu0
    %1185 = vmatpush.bf16.msra.mxu0 %v1053
    %1186 = vmatpush.bf16.msra.mxu0 %v1045
    %1187 = vmatpush.bf16.msra.mxu0 %v1037
    %1188 = vmatpush.bf16.msra.mxu0 %v1029
    %1189 = vmatpush.bf16.msra.mxu0 %v1021
    %1190 = vmatpush.bf16.msra.mxu0 %v1013
    %1191 = vmatpush.bf16.msra.mxu0 %v1005
    %1192 = vmatpush.bf16.msra.mxu0 %v997
    %1193 = vmatmul.bf16.gmra.mxu0 %v717
    %v1194 = vpop.f32.mrf.mxu0
    %v1195 = vadd.f32 %v789, %v1194
    %v1196 = vpop.f32.mrf.mxu0
    %1197 = vdwg.mxu0
    %1198 = vmatpush.bf16.msra.mxu0 %v1054
    %1199 = vmatpush.bf16.msra.mxu0 %v1046
    %1200 = vmatpush.bf16.msra.mxu0 %v1038
    %1201 = vmatpush.bf16.msra.mxu0 %v1030
    %1202 = vmatpush.bf16.msra.mxu0 %v1022
    %1203 = vmatpush.bf16.msra.mxu0 %v1014
    %1204 = vmatpush.bf16.msra.mxu0 %v1006
    %1205 = vmatpush.bf16.msra.mxu0 %v998
    %1206 = vmatmul.bf16.gmra.mxu0 %v717
    %v1207 = vpop.f32.mrf.mxu0
    %v1208 = vadd.f32 %v790, %v1207
    %v1209 = vpop.f32.mrf.mxu0
    %1210 = vdwg.mxu0
    %1211 = vmatpush.bf16.msra.mxu0 %v1055
    %1212 = vmatpush.bf16.msra.mxu0 %v1047
    %1213 = vmatpush.bf16.msra.mxu0 %v1039
    %1214 = vmatpush.bf16.msra.mxu0 %v1031
    %1215 = vmatpush.bf16.msra.mxu0 %v1023
    %1216 = vmatpush.bf16.msra.mxu0 %v1015
    %1217 = vmatpush.bf16.msra.mxu0 %v1007
    %1218 = vmatpush.bf16.msra.mxu0 %v999
    %1219 = vmatmul.bf16.gmra.mxu0 %v717
    %v1220 = vpop.f32.mrf.mxu0
    %v1221 = vadd.f32 %v791, %v1220
    %v1222 = vpop.f32.mrf.mxu0
    %1223 = vdwg.mxu0
    %v1224 = vsub.f32 0.0, %v1130
    %v1225 = vsub.f32 0.0, %v1143
    %v1226 = vsub.f32 0.0, %v1156
    %v1227 = vsub.f32 0.0, %v1169
    %v1228 = vsub.f32 0.0, %v1182
    %v1229 = vsub.f32 0.0, %v1195
    %v1230 = vsub.f32 0.0, %v1208
    %v1231 = vsub.f32 0.0, %v1221
    %v1232 = vmul.f32 %v1224, 1.442695
    %v1233 = vpow.pop %v1232
    %v1234 = vmul.f32 %v1225, 1.442695
    %v1235 = vpow.pop %v1234
    %v1236 = vmul.f32 %v1226, 1.442695
    %v1237 = vpow.pop %v1236
    %v1238 = vmul.f32 %v1227, 1.442695
    %v1239 = vpow.pop %v1238
    %v1240 = vmul.f32 %v1228, 1.442695
    %v1241 = vpow.pop %v1240
    %v1242 = vmul.f32 %v1229, 1.442695
    %v1243 = vpow.pop %v1242
    %v1244 = vmul.f32 %v1230, 1.442695
    %v1245 = vpow.pop %v1244
    %v1246 = vmul.f32 %v1231, 1.442695
    %v1247 = vpow.pop %v1246
    %v1248 = vadd.f32 %v1233, 1.0
    %v1249 = vadd.f32 %v1235, 1.0
    %v1250 = vadd.f32 %v1237, 1.0
    %v1251 = vadd.f32 %v1239, 1.0
    %v1252 = vadd.f32 %v1241, 1.0
    %v1253 = vadd.f32 %v1243, 1.0
    %v1254 = vadd.f32 %v1245, 1.0
    %v1255 = vadd.f32 %v1247, 1.0
    %v1256 = vrcp.pop %v1248
    %v1257 = vrcp.pop %v1249
    %v1258 = vrcp.pop %v1250
    %v1259 = vrcp.pop %v1251
    %v1260 = vrcp.pop %v1252
    %v1261 = vrcp.pop %v1253
    %v1262 = vrcp.pop %v1254
    %v1263 = vrcp.pop %v1255
    %v1264 = vpack.c.bf16 %v1257, %v1256
    %v1265 = vpack.c.bf16 %v1259, %v1258
    %v1266 = vpack.c.bf16 %v1261, %v1260
    %v1267 = vpack.c.bf16 %v1263, %v1262
    %1268 = vst [vmem:[#allocation10] sm:$0xff] %v1264
    %1269 = vst [vmem:[#allocation10 + $0x8] sm:$0xff] %v1265
    %1270 = vst [vmem:[#allocation10 + $0x10] sm:$0xff] %v1266
    %1271 = vst [vmem:[#allocation10 + $0x18] sm:$0xff] %v1267
    // Predicated region
    $region38: #{tpu_custom_call.1} parent=1 // pred_check
      _
    $region39: #{tpu_custom_call.1} parent=1 // pred_check_branch
      %1273 = sbr.rel (0) target = $region41
    $region40: #{tpu_custom_call.1} parent=1 // pred_region
      %1275 = vsyncadd [#allocation4], 0
      %s1277 = sshll.u32 [#allocation10], 4
      %s1278 = int_to_ptr.vmem [resolvable:$true] %s1277
      %s1279 = sshll.u32 %s5, 4
      %s1280 = int_to_ptr.hbm [resolvable:$true] %s1279
      %1282 = dma.vmem_to_hbm [thread:$0]  %s1278, 512, %s1280, [#allocation4]
    $region41: #{tpu_custom_call.1} parent=1 // pred_fallthru
      _
    // Predicated region
    $region42: #{tpu_custom_call.1} parent=1 // pred_check
      _
    $region43: #{tpu_custom_call.1} parent=1 // pred_check_branch
      %1284 = sbr.rel (0) target = $region45
    $region44: #{tpu_custom_call.1} parent=1 // pred_region
      %1286 = dma.done [#allocation4], 512
    $region45: #{tpu_custom_call.1} parent=1 // pred_fallthru
      _
    %1287 = vsyncpa [#allocation3], 1
    %1288 = vsyncpa [#allocation6], 1
    %1289 = vsyncpa [#allocation9], 1
    %1290 = vsyncpa [#allocation4], 1

</llo_original>
